<compile_context>
chip_gen: v7x
topology: tpu7x:2x2x1
jax: 0.10.0
libtpu: 0.0.40
codegen_flags: <defaults>
</compile_context>

<pallas_src>
import jax
import jax.numpy as jnp
from jax import lax
from jax.experimental import pallas as pl
from jax.experimental.pallas import tpu as pltpu


# ----------------------------------------------------------------------------
# Fused kernel factory: [stacked GRU layers] -> Linear -> sigmoid, all in VMEM.
# PyTorch GRU packed gate order is [r, z, n]; weights arrive pre-transposed
# (D, 3D) so gates = x @ W + b.  Input / output rows are time-major (t*B + b).
# ----------------------------------------------------------------------------
def _make_supervisor_kernel(B, T, D, n_gru_layers):
    def kernel(*refs):
        x_ref = refs[0]                                # (T*B, D)  time-major rows
        layer_refs = refs[1:1 + 4 * n_gru_layers]      # (wih, whh, b_fold, b_hn) / layer
        wfc_ref = refs[1 + 4 * n_gru_layers]           # (D, D)
        bfc_ref = refs[2 + 4 * n_gru_layers]           # (1, D)
        out_ref = refs[3 + 4 * n_gru_layers]           # (T*B, D)  time-major rows

        seq = x_ref[...].astype(jnp.float32)           # activations live in vregs

        for l in range(n_gru_layers):
            wih_ref, whh_ref, bfold_ref, bhn_ref = layer_refs[4 * l:4 * (l + 1)]

            # Input projection for ALL timesteps in one MXU matmul, hoisted out
            # of the recurrence; r/z hidden biases were pre-folded into b_fold.
            gi_all = (jnp.dot(seq, wih_ref[...],
                              preferred_element_type=jnp.float32)
                      + bfold_ref[...])                 # (T*B, 3D)

            whh = whh_ref[...]                          # (D, 3D), hoisted load
            bhn = bhn_ref[...]                          # (1, D)   n-gate hidden bias

            h = jnp.zeros((B, D), jnp.float32)
            hs = []
            for t in range(T):                          # static unrolled recurrence
                gi = gi_all[t * B:(t + 1) * B, :]       # static vreg slice, no VMEM
                gh = jnp.dot(h, whh, preferred_element_type=jnp.float32)
                r = jax.nn.sigmoid(gi[:, :D] + gh[:, :D])
                z = jax.nn.sigmoid(gi[:, D:2 * D] + gh[:, D:2 * D])
                n = jnp.tanh(gi[:, 2 * D:] + r * (gh[:, 2 * D:] + bhn))
                h = (1.0 - z) * n + z * h
                hs.append(h)
            seq = jnp.concatenate(hs, axis=0)           # (T*B, D) time-major

        # Epilogue: Linear + sigmoid, single (T*B, D) slab store.
        y = jnp.dot(seq, wfc_ref[...],
                    preferred_element_type=jnp.float32) + bfc_ref[...]
        out_ref[...] = jax.nn.sigmoid(y).astype(out_ref.dtype)

    return kernel


# ----------------------------------------------------------------------------
# Supervisor forward.  Wrapper does only the (free) transposes / reshapes and
# the exact bias folding; all compute is inside the single pallas_call.
# ----------------------------------------------------------------------------
def _supervisor_forward(H_in, params):
    """H_in: (B, T, latent_dim), batch-first, like the PyTorch module."""
    B, T, D = H_in.shape
    L = len(params["gru_layers"])
    TB = T * B

    def full(shape):
        return pl.BlockSpec(shape, lambda i, _n=len(shape): (0,) * _n)

    # Time-major rows (t*B + b); transposing a ~4 KiB array in XLA is free.
    x_tm = jnp.transpose(H_in.astype(jnp.float32), (1, 0, 2)).reshape(TB, D)

    args = [x_tm]
    in_specs = [full((TB, D))]
    for (w_ih, w_hh, b_ih, b_hh) in params["gru_layers"]:
        # Exact folding per PyTorch GRU math: b_hr/b_hz merge with b_ir/b_iz;
        # b_hn must stay inside r*(...) so it is passed separately.
        b_fold = jnp.concatenate([b_ih[:2 * D] + b_hh[:2 * D],
                                  b_ih[2 * D:]]).reshape(1, 3 * D)
        b_hn = b_hh[2 * D:].reshape(1, D)
        args += [w_ih.T, w_hh.T, b_fold, b_hn]
        in_specs += [full((D, 3 * D)), full((D, 3 * D)),
                     full((1, 3 * D)), full((1, D))]
    args += [params["fc_w"].T, params["fc_b"].reshape(1, D)]
    in_specs += [full((D, D)), full((1, D))]

    y_tm = pl.pallas_call(
        _make_supervisor_kernel(B, T, D, L),
        out_shape=jax.ShapeDtypeStruct((TB, D), jnp.float32),
        grid_spec=pltpu.PrefetchScalarGridSpec(
            num_scalar_prefetch=0,
            grid=(1,),
            in_specs=in_specs,
            out_specs=full((TB, D)),
        ),
        compiler_params=pltpu.CompilerParams(
            dimension_semantics=("arbitrary",)),
    )(*args)

    return jnp.transpose(y_tm.reshape(T, B, D), (1, 0, 2))   # back to batch-first


supervisor_forward = jax.jit(_supervisor_forward)


# ----------------------------------------------------------------------------
# Deterministic parameter init (PyTorch default: U(-1/sqrt(H), 1/sqrt(H))).
# Stored in raw PyTorch layout: w_* are (3D, D), biases are (3D,).
# ----------------------------------------------------------------------------
def init_params(key, latent_dim, num_layers):
    k = 1.0 / jnp.sqrt(latent_dim)
    n_gru_layers = num_layers - 1
    keys = jax.random.split(key, 4 * n_gru_layers + 2)
    gru_layers = []
    for l in range(n_gru_layers):
        kw = keys[4 * l: 4 * l + 4]
        w_ih = jax.random.uniform(kw[0], (3 * latent_dim, latent_dim), jnp.float32, -k, k)
        w_hh = jax.random.uniform(kw[1], (3 * latent_dim, latent_dim), jnp.float32, -k, k)
        b_ih = jax.random.uniform(kw[2], (3 * latent_dim,), jnp.float32, -k, k)
        b_hh = jax.random.uniform(kw[3], (3 * latent_dim,), jnp.float32, -k, k)
        gru_layers.append((w_ih, w_hh, b_ih, b_hh))
    fc_w = jax.random.uniform(keys[-2], (latent_dim, latent_dim), jnp.float32, -k, k)
    fc_b = jax.random.uniform(keys[-1], (latent_dim,), jnp.float32, -k, k)
    return {"gru_layers": gru_layers, "fc_w": fc_w, "fc_b": fc_b}


# ----------------------------------------------------------------------------
# Pure-JAX reference with the literal (unfolded) PyTorch GRU equations.
# ----------------------------------------------------------------------------
def reference_forward(H_in, params):
    B, T, D = H_in.shape
    x = H_in.astype(jnp.float32)                       # (B, T, D) batch-first
    for (w_ih, w_hh, b_ih, b_hh) in params["gru_layers"]:
        h = jnp.zeros((B, D), jnp.float32)
        outs = []
        for t in range(T):
            gi = x[:, t] @ w_ih.T + b_ih
            gh = h @ w_hh.T + b_hh
            r = jax.nn.sigmoid(gi[:, :D] + gh[:, :D])
            z = jax.nn.sigmoid(gi[:, D:2 * D] + gh[:, D:2 * D])
            n = jnp.tanh(gi[:, 2 * D:] + r * gh[:, 2 * D:])
            h = (1.0 - z) * n + z * h
            outs.append(h)
        x = jnp.stack(outs, axis=1)                    # (B, T, D)
    return jax.nn.sigmoid(x @ params["fc_w"].T + params["fc_b"])


if __name__ == "__main__":
    # Supervisor(module_name='gru', feat_dim=4, seq_len=8, latent_dim=32, num_layers=3)
    # (feat_dim / seq_len only influence data shapes, not the module params)
    B, T, latent_dim, num_layers = 4, 8, 32, 3

    key = jax.random.PRNGKey(0)
    k_param, k_data = jax.random.split(key)
    params = init_params(k_param, latent_dim, num_layers)
    H_in = jax.random.normal(k_data, (B, T, latent_dim), jnp.float32)

    S = jax.block_until_ready(supervisor_forward(H_in, params))

    S_ref = reference_forward(H_in, params)
    assert S.shape == (B, T, latent_dim)
    assert jnp.max(jnp.abs(S - S_ref)) < 1e-4

    print("KERNEL_OK")
</pallas_src>

<mosaic_0001>
module attributes {stable_mosaic.version = 11 : i64} {
  func.func @kernel(%arg0: i32, %arg1: memref<32x32xf32, #tpu.memory_space<vmem>>, %arg2: memref<32x96xf32, #tpu.memory_space<vmem>>, %arg3: memref<32x96xf32, #tpu.memory_space<vmem>>, %arg4: memref<1x96xf32, #tpu.memory_space<vmem>>, %arg5: memref<1x32xf32, #tpu.memory_space<vmem>>, %arg6: memref<32x96xf32, #tpu.memory_space<vmem>>, %arg7: memref<32x96xf32, #tpu.memory_space<vmem>>, %arg8: memref<1x96xf32, #tpu.memory_space<vmem>>, %arg9: memref<1x32xf32, #tpu.memory_space<vmem>>, %arg10: memref<32x32xf32, #tpu.memory_space<vmem>>, %arg11: memref<1x32xf32, #tpu.memory_space<vmem>>, %arg12: memref<32x32xf32, #tpu.memory_space<vmem>>) attributes {dimension_semantics = [#tpu.dimension_semantics<arbitrary>], iteration_bounds = array<i64: 1>, scalar_prefetch = 0 : i64, scratch_operands = 0 : i64, tpu.core_type = #tpu.core_type<tc>, window_params = [{pipeline_mode = #tpu.pipeline_mode<synchronous>, transform_indices = @transform_0, window_bounds = array<i64: 32, 32>}, {pipeline_mode = #tpu.pipeline_mode<synchronous>, transform_indices = @transform_1, window_bounds = array<i64: 32, 96>}, {pipeline_mode = #tpu.pipeline_mode<synchronous>, transform_indices = @transform_2, window_bounds = array<i64: 32, 96>}, {pipeline_mode = #tpu.pipeline_mode<synchronous>, transform_indices = @transform_3, window_bounds = array<i64: 1, 96>}, {pipeline_mode = #tpu.pipeline_mode<synchronous>, transform_indices = @transform_4, window_bounds = array<i64: 1, 32>}, {pipeline_mode = #tpu.pipeline_mode<synchronous>, transform_indices = @transform_5, window_bounds = array<i64: 32, 96>}, {pipeline_mode = #tpu.pipeline_mode<synchronous>, transform_indices = @transform_6, window_bounds = array<i64: 32, 96>}, {pipeline_mode = #tpu.pipeline_mode<synchronous>, transform_indices = @transform_7, window_bounds = array<i64: 1, 96>}, {pipeline_mode = #tpu.pipeline_mode<synchronous>, transform_indices = @transform_8, window_bounds = array<i64: 1, 32>}, {pipeline_mode = #tpu.pipeline_mode<synchronous>, transform_indices = @transform_9, window_bounds = array<i64: 32, 32>}, {pipeline_mode = #tpu.pipeline_mode<synchronous>, transform_indices = @transform_10, window_bounds = array<i64: 1, 32>}, {pipeline_mode = #tpu.pipeline_mode<synchronous>, transform_indices = @transform_11, window_bounds = array<i64: 32, 32>}]} {
    %c0 = arith.constant 0 : index
    %c0_0 = arith.constant 0 : index
    %0 = vector.load %arg1[%c0, %c0_0] : memref<32x32xf32, #tpu.memory_space<vmem>>, vector<32x32xf32>
    %c0_1 = arith.constant 0 : index
    %c0_2 = arith.constant 0 : index
    %1 = vector.load %arg2[%c0_1, %c0_2] : memref<32x96xf32, #tpu.memory_space<vmem>>, vector<32x96xf32>
    %cst = arith.constant dense<0.000000e+00> : vector<32x96xf32>
    %2 = tpu.matmul %0, %1, %cst {dimension_numbers = #tpu.dot_dimension_numbers<[1], [0], [0], [1], [0, 0, 1, 1], [], []>} : vector<32x32xf32>, vector<32x96xf32>, vector<32x96xf32> -> vector<32x96xf32>
    %c0_3 = arith.constant 0 : index
    %c0_4 = arith.constant 0 : index
    %3 = vector.load %arg4[%c0_3, %c0_4] : memref<1x96xf32, #tpu.memory_space<vmem>>, vector<1x96xf32>
    %4 = vector.broadcast %3 : vector<1x96xf32> to vector<32x96xf32>
    %5 = arith.addf %2, %4 : vector<32x96xf32>
    %c0_5 = arith.constant 0 : index
    %c0_6 = arith.constant 0 : index
    %6 = vector.load %arg3[%c0_5, %c0_6] : memref<32x96xf32, #tpu.memory_space<vmem>>, vector<32x96xf32>
    %c0_7 = arith.constant 0 : index
    %c0_8 = arith.constant 0 : index
    %7 = vector.load %arg5[%c0_7, %c0_8] : memref<1x32xf32, #tpu.memory_space<vmem>>, vector<1x32xf32>
    %cst_9 = arith.constant 0.000000e+00 : f32
    %8 = vector.broadcast %cst_9 : f32 to vector<4x32xf32>
    %9 = vector.extract_strided_slice %5 {offsets = [0, 0], sizes = [4, 96], strides = [1, 1]} : vector<32x96xf32> to vector<4x96xf32>
    %cst_10 = arith.constant dense<0.000000e+00> : vector<4x96xf32>
    %10 = tpu.matmul %8, %6, %cst_10 {dimension_numbers = #tpu.dot_dimension_numbers<[1], [0], [0], [1], [0, 0, 1, 1], [], []>} : vector<4x32xf32>, vector<32x96xf32>, vector<4x96xf32> -> vector<4x96xf32>
    %11 = vector.extract_strided_slice %9 {offsets = [0, 0], sizes = [4, 32], strides = [1, 1]} : vector<4x96xf32> to vector<4x32xf32>
    %12 = vector.extract_strided_slice %10 {offsets = [0, 0], sizes = [4, 32], strides = [1, 1]} : vector<4x96xf32> to vector<4x32xf32>
    %13 = arith.addf %11, %12 : vector<4x32xf32>
    %14 = arith.negf %13 : vector<4x32xf32>
    %15 = math.exp %14 : vector<4x32xf32>
    %cst_11 = arith.constant 1.000000e+00 : f32
    %16 = vector.broadcast %cst_11 : f32 to vector<4x32xf32>
    %17 = arith.addf %16, %15 : vector<4x32xf32>
    %18 = arith.divf %16, %17 : vector<4x32xf32>
    %19 = vector.extract_strided_slice %9 {offsets = [0, 32], sizes = [4, 32], strides = [1, 1]} : vector<4x96xf32> to vector<4x32xf32>
    %20 = vector.extract_strided_slice %10 {offsets = [0, 32], sizes = [4, 32], strides = [1, 1]} : vector<4x96xf32> to vector<4x32xf32>
    %21 = arith.addf %19, %20 : vector<4x32xf32>
    %22 = arith.negf %21 : vector<4x32xf32>
    %23 = math.exp %22 : vector<4x32xf32>
    %cst_12 = arith.constant 1.000000e+00 : f32
    %24 = vector.broadcast %cst_12 : f32 to vector<4x32xf32>
    %25 = arith.addf %24, %23 : vector<4x32xf32>
    %26 = arith.divf %24, %25 : vector<4x32xf32>
    %27 = vector.extract_strided_slice %9 {offsets = [0, 64], sizes = [4, 32], strides = [1, 1]} : vector<4x96xf32> to vector<4x32xf32>
    %28 = vector.extract_strided_slice %10 {offsets = [0, 64], sizes = [4, 32], strides = [1, 1]} : vector<4x96xf32> to vector<4x32xf32>
    %29 = vector.broadcast %7 : vector<1x32xf32> to vector<4x32xf32>
    %30 = arith.addf %28, %29 : vector<4x32xf32>
    %31 = arith.mulf %18, %30 : vector<4x32xf32>
    %32 = arith.addf %27, %31 : vector<4x32xf32>
    %33 = math.tanh %32 : vector<4x32xf32>
    %cst_13 = arith.constant 1.000000e+00 : f32
    %34 = vector.broadcast %cst_13 : f32 to vector<4x32xf32>
    %35 = arith.subf %34, %26 : vector<4x32xf32>
    %36 = arith.mulf %35, %33 : vector<4x32xf32>
    %37 = arith.mulf %26, %8 : vector<4x32xf32>
    %38 = arith.addf %36, %37 : vector<4x32xf32>
    %39 = vector.extract_strided_slice %5 {offsets = [4, 0], sizes = [4, 96], strides = [1, 1]} : vector<32x96xf32> to vector<4x96xf32>
    %cst_14 = arith.constant dense<0.000000e+00> : vector<4x96xf32>
    %40 = tpu.matmul %38, %6, %cst_14 {dimension_numbers = #tpu.dot_dimension_numbers<[1], [0], [0], [1], [0, 0, 1, 1], [], []>} : vector<4x32xf32>, vector<32x96xf32>, vector<4x96xf32> -> vector<4x96xf32>
    %41 = vector.extract_strided_slice %39 {offsets = [0, 0], sizes = [4, 32], strides = [1, 1]} : vector<4x96xf32> to vector<4x32xf32>
    %42 = vector.extract_strided_slice %40 {offsets = [0, 0], sizes = [4, 32], strides = [1, 1]} : vector<4x96xf32> to vector<4x32xf32>
    %43 = arith.addf %41, %42 : vector<4x32xf32>
    %44 = arith.negf %43 : vector<4x32xf32>
    %45 = math.exp %44 : vector<4x32xf32>
    %cst_15 = arith.constant 1.000000e+00 : f32
    %46 = vector.broadcast %cst_15 : f32 to vector<4x32xf32>
    %47 = arith.addf %46, %45 : vector<4x32xf32>
    %48 = arith.divf %46, %47 : vector<4x32xf32>
    %49 = vector.extract_strided_slice %39 {offsets = [0, 32], sizes = [4, 32], strides = [1, 1]} : vector<4x96xf32> to vector<4x32xf32>
    %50 = vector.extract_strided_slice %40 {offsets = [0, 32], sizes = [4, 32], strides = [1, 1]} : vector<4x96xf32> to vector<4x32xf32>
    %51 = arith.addf %49, %50 : vector<4x32xf32>
    %52 = arith.negf %51 : vector<4x32xf32>
    %53 = math.exp %52 : vector<4x32xf32>
    %cst_16 = arith.constant 1.000000e+00 : f32
    %54 = vector.broadcast %cst_16 : f32 to vector<4x32xf32>
    %55 = arith.addf %54, %53 : vector<4x32xf32>
    %56 = arith.divf %54, %55 : vector<4x32xf32>
    %57 = vector.extract_strided_slice %39 {offsets = [0, 64], sizes = [4, 32], strides = [1, 1]} : vector<4x96xf32> to vector<4x32xf32>
    %58 = vector.extract_strided_slice %40 {offsets = [0, 64], sizes = [4, 32], strides = [1, 1]} : vector<4x96xf32> to vector<4x32xf32>
    %59 = vector.broadcast %7 : vector<1x32xf32> to vector<4x32xf32>
    %60 = arith.addf %58, %59 : vector<4x32xf32>
    %61 = arith.mulf %48, %60 : vector<4x32xf32>
    %62 = arith.addf %57, %61 : vector<4x32xf32>
    %63 = math.tanh %62 : vector<4x32xf32>
    %cst_17 = arith.constant 1.000000e+00 : f32
    %64 = vector.broadcast %cst_17 : f32 to vector<4x32xf32>
    %65 = arith.subf %64, %56 : vector<4x32xf32>
    %66 = arith.mulf %65, %63 : vector<4x32xf32>
    %67 = arith.mulf %56, %38 : vector<4x32xf32>
    %68 = arith.addf %66, %67 : vector<4x32xf32>
    %69 = vector.extract_strided_slice %5 {offsets = [8, 0], sizes = [4, 96], strides = [1, 1]} : vector<32x96xf32> to vector<4x96xf32>
    %cst_18 = arith.constant dense<0.000000e+00> : vector<4x96xf32>
    %70 = tpu.matmul %68, %6, %cst_18 {dimension_numbers = #tpu.dot_dimension_numbers<[1], [0], [0], [1], [0, 0, 1, 1], [], []>} : vector<4x32xf32>, vector<32x96xf32>, vector<4x96xf32> -> vector<4x96xf32>
    %71 = vector.extract_strided_slice %69 {offsets = [0, 0], sizes = [4, 32], strides = [1, 1]} : vector<4x96xf32> to vector<4x32xf32>
    %72 = vector.extract_strided_slice %70 {offsets = [0, 0], sizes = [4, 32], strides = [1, 1]} : vector<4x96xf32> to vector<4x32xf32>
    %73 = arith.addf %71, %72 : vector<4x32xf32>
    %74 = arith.negf %73 : vector<4x32xf32>
    %75 = math.exp %74 : vector<4x32xf32>
    %cst_19 = arith.constant 1.000000e+00 : f32
    %76 = vector.broadcast %cst_19 : f32 to vector<4x32xf32>
    %77 = arith.addf %76, %75 : vector<4x32xf32>
    %78 = arith.divf %76, %77 : vector<4x32xf32>
    %79 = vector.extract_strided_slice %69 {offsets = [0, 32], sizes = [4, 32], strides = [1, 1]} : vector<4x96xf32> to vector<4x32xf32>
    %80 = vector.extract_strided_slice %70 {offsets = [0, 32], sizes = [4, 32], strides = [1, 1]} : vector<4x96xf32> to vector<4x32xf32>
    %81 = arith.addf %79, %80 : vector<4x32xf32>
    %82 = arith.negf %81 : vector<4x32xf32>
    %83 = math.exp %82 : vector<4x32xf32>
    %cst_20 = arith.constant 1.000000e+00 : f32
    %84 = vector.broadcast %cst_20 : f32 to vector<4x32xf32>
    %85 = arith.addf %84, %83 : vector<4x32xf32>
    %86 = arith.divf %84, %85 : vector<4x32xf32>
    %87 = vector.extract_strided_slice %69 {offsets = [0, 64], sizes = [4, 32], strides = [1, 1]} : vector<4x96xf32> to vector<4x32xf32>
    %88 = vector.extract_strided_slice %70 {offsets = [0, 64], sizes = [4, 32], strides = [1, 1]} : vector<4x96xf32> to vector<4x32xf32>
    %89 = vector.broadcast %7 : vector<1x32xf32> to vector<4x32xf32>
    %90 = arith.addf %88, %89 : vector<4x32xf32>
    %91 = arith.mulf %78, %90 : vector<4x32xf32>
    %92 = arith.addf %87, %91 : vector<4x32xf32>
    %93 = math.tanh %92 : vector<4x32xf32>
    %cst_21 = arith.constant 1.000000e+00 : f32
    %94 = vector.broadcast %cst_21 : f32 to vector<4x32xf32>
    %95 = arith.subf %94, %86 : vector<4x32xf32>
    %96 = arith.mulf %95, %93 : vector<4x32xf32>
    %97 = arith.mulf %86, %68 : vector<4x32xf32>
    %98 = arith.addf %96, %97 : vector<4x32xf32>
    %99 = vector.extract_strided_slice %5 {offsets = [12, 0], sizes = [4, 96], strides = [1, 1]} : vector<32x96xf32> to vector<4x96xf32>
    %cst_22 = arith.constant dense<0.000000e+00> : vector<4x96xf32>
    %100 = tpu.matmul %98, %6, %cst_22 {dimension_numbers = #tpu.dot_dimension_numbers<[1], [0], [0], [1], [0, 0, 1, 1], [], []>} : vector<4x32xf32>, vector<32x96xf32>, vector<4x96xf32> -> vector<4x96xf32>
    %101 = vector.extract_strided_slice %99 {offsets = [0, 0], sizes = [4, 32], strides = [1, 1]} : vector<4x96xf32> to vector<4x32xf32>
    %102 = vector.extract_strided_slice %100 {offsets = [0, 0], sizes = [4, 32], strides = [1, 1]} : vector<4x96xf32> to vector<4x32xf32>
    %103 = arith.addf %101, %102 : vector<4x32xf32>
    %104 = arith.negf %103 : vector<4x32xf32>
    %105 = math.exp %104 : vector<4x32xf32>
    %cst_23 = arith.constant 1.000000e+00 : f32
    %106 = vector.broadcast %cst_23 : f32 to vector<4x32xf32>
    %107 = arith.addf %106, %105 : vector<4x32xf32>
    %108 = arith.divf %106, %107 : vector<4x32xf32>
    %109 = vector.extract_strided_slice %99 {offsets = [0, 32], sizes = [4, 32], strides = [1, 1]} : vector<4x96xf32> to vector<4x32xf32>
    %110 = vector.extract_strided_slice %100 {offsets = [0, 32], sizes = [4, 32], strides = [1, 1]} : vector<4x96xf32> to vector<4x32xf32>
    %111 = arith.addf %109, %110 : vector<4x32xf32>
    %112 = arith.negf %111 : vector<4x32xf32>
    %113 = math.exp %112 : vector<4x32xf32>
    %cst_24 = arith.constant 1.000000e+00 : f32
    %114 = vector.broadcast %cst_24 : f32 to vector<4x32xf32>
    %115 = arith.addf %114, %113 : vector<4x32xf32>
    %116 = arith.divf %114, %115 : vector<4x32xf32>
    %117 = vector.extract_strided_slice %99 {offsets = [0, 64], sizes = [4, 32], strides = [1, 1]} : vector<4x96xf32> to vector<4x32xf32>
    %118 = vector.extract_strided_slice %100 {offsets = [0, 64], sizes = [4, 32], strides = [1, 1]} : vector<4x96xf32> to vector<4x32xf32>
    %119 = vector.broadcast %7 : vector<1x32xf32> to vector<4x32xf32>
    %120 = arith.addf %118, %119 : vector<4x32xf32>
    %121 = arith.mulf %108, %120 : vector<4x32xf32>
    %122 = arith.addf %117, %121 : vector<4x32xf32>
    %123 = math.tanh %122 : vector<4x32xf32>
    %cst_25 = arith.constant 1.000000e+00 : f32
    %124 = vector.broadcast %cst_25 : f32 to vector<4x32xf32>
    %125 = arith.subf %124, %116 : vector<4x32xf32>
    %126 = arith.mulf %125, %123 : vector<4x32xf32>
    %127 = arith.mulf %116, %98 : vector<4x32xf32>
    %128 = arith.addf %126, %127 : vector<4x32xf32>
    %129 = vector.extract_strided_slice %5 {offsets = [16, 0], sizes = [4, 96], strides = [1, 1]} : vector<32x96xf32> to vector<4x96xf32>
    %cst_26 = arith.constant dense<0.000000e+00> : vector<4x96xf32>
    %130 = tpu.matmul %128, %6, %cst_26 {dimension_numbers = #tpu.dot_dimension_numbers<[1], [0], [0], [1], [0, 0, 1, 1], [], []>} : vector<4x32xf32>, vector<32x96xf32>, vector<4x96xf32> -> vector<4x96xf32>
    %131 = vector.extract_strided_slice %129 {offsets = [0, 0], sizes = [4, 32], strides = [1, 1]} : vector<4x96xf32> to vector<4x32xf32>
    %132 = vector.extract_strided_slice %130 {offsets = [0, 0], sizes = [4, 32], strides = [1, 1]} : vector<4x96xf32> to vector<4x32xf32>
    %133 = arith.addf %131, %132 : vector<4x32xf32>
    %134 = arith.negf %133 : vector<4x32xf32>
    %135 = math.exp %134 : vector<4x32xf32>
    %cst_27 = arith.constant 1.000000e+00 : f32
    %136 = vector.broadcast %cst_27 : f32 to vector<4x32xf32>
    %137 = arith.addf %136, %135 : vector<4x32xf32>
    %138 = arith.divf %136, %137 : vector<4x32xf32>
    %139 = vector.extract_strided_slice %129 {offsets = [0, 32], sizes = [4, 32], strides = [1, 1]} : vector<4x96xf32> to vector<4x32xf32>
    %140 = vector.extract_strided_slice %130 {offsets = [0, 32], sizes = [4, 32], strides = [1, 1]} : vector<4x96xf32> to vector<4x32xf32>
    %141 = arith.addf %139, %140 : vector<4x32xf32>
    %142 = arith.negf %141 : vector<4x32xf32>
    %143 = math.exp %142 : vector<4x32xf32>
    %cst_28 = arith.constant 1.000000e+00 : f32
    %144 = vector.broadcast %cst_28 : f32 to vector<4x32xf32>
    %145 = arith.addf %144, %143 : vector<4x32xf32>
    %146 = arith.divf %144, %145 : vector<4x32xf32>
    %147 = vector.extract_strided_slice %129 {offsets = [0, 64], sizes = [4, 32], strides = [1, 1]} : vector<4x96xf32> to vector<4x32xf32>
    %148 = vector.extract_strided_slice %130 {offsets = [0, 64], sizes = [4, 32], strides = [1, 1]} : vector<4x96xf32> to vector<4x32xf32>
    %149 = vector.broadcast %7 : vector<1x32xf32> to vector<4x32xf32>
    %150 = arith.addf %148, %149 : vector<4x32xf32>
    %151 = arith.mulf %138, %150 : vector<4x32xf32>
    %152 = arith.addf %147, %151 : vector<4x32xf32>
    %153 = math.tanh %152 : vector<4x32xf32>
    %cst_29 = arith.constant 1.000000e+00 : f32
    %154 = vector.broadcast %cst_29 : f32 to vector<4x32xf32>
    %155 = arith.subf %154, %146 : vector<4x32xf32>
    %156 = arith.mulf %155, %153 : vector<4x32xf32>
    %157 = arith.mulf %146, %128 : vector<4x32xf32>
    %158 = arith.addf %156, %157 : vector<4x32xf32>
    %159 = vector.extract_strided_slice %5 {offsets = [20, 0], sizes = [4, 96], strides = [1, 1]} : vector<32x96xf32> to vector<4x96xf32>
    %cst_30 = arith.constant dense<0.000000e+00> : vector<4x96xf32>
    %160 = tpu.matmul %158, %6, %cst_30 {dimension_numbers = #tpu.dot_dimension_numbers<[1], [0], [0], [1], [0, 0, 1, 1], [], []>} : vector<4x32xf32>, vector<32x96xf32>, vector<4x96xf32> -> vector<4x96xf32>
    %161 = vector.extract_strided_slice %159 {offsets = [0, 0], sizes = [4, 32], strides = [1, 1]} : vector<4x96xf32> to vector<4x32xf32>
    %162 = vector.extract_strided_slice %160 {offsets = [0, 0], sizes = [4, 32], strides = [1, 1]} : vector<4x96xf32> to vector<4x32xf32>
    %163 = arith.addf %161, %162 : vector<4x32xf32>
    %164 = arith.negf %163 : vector<4x32xf32>
    %165 = math.exp %164 : vector<4x32xf32>
    %cst_31 = arith.constant 1.000000e+00 : f32
    %166 = vector.broadcast %cst_31 : f32 to vector<4x32xf32>
    %167 = arith.addf %166, %165 : vector<4x32xf32>
    %168 = arith.divf %166, %167 : vector<4x32xf32>
    %169 = vector.extract_strided_slice %159 {offsets = [0, 32], sizes = [4, 32], strides = [1, 1]} : vector<4x96xf32> to vector<4x32xf32>
    %170 = vector.extract_strided_slice %160 {offsets = [0, 32], sizes = [4, 32], strides = [1, 1]} : vector<4x96xf32> to vector<4x32xf32>
    %171 = arith.addf %169, %170 : vector<4x32xf32>
    %172 = arith.negf %171 : vector<4x32xf32>
    %173 = math.exp %172 : vector<4x32xf32>
    %cst_32 = arith.constant 1.000000e+00 : f32
    %174 = vector.broadcast %cst_32 : f32 to vector<4x32xf32>
    %175 = arith.addf %174, %173 : vector<4x32xf32>
    %176 = arith.divf %174, %175 : vector<4x32xf32>
    %177 = vector.extract_strided_slice %159 {offsets = [0, 64], sizes = [4, 32], strides = [1, 1]} : vector<4x96xf32> to vector<4x32xf32>
    %178 = vector.extract_strided_slice %160 {offsets = [0, 64], sizes = [4, 32], strides = [1, 1]} : vector<4x96xf32> to vector<4x32xf32>
    %179 = vector.broadcast %7 : vector<1x32xf32> to vector<4x32xf32>
    %180 = arith.addf %178, %179 : vector<4x32xf32>
    %181 = arith.mulf %168, %180 : vector<4x32xf32>
    %182 = arith.addf %177, %181 : vector<4x32xf32>
    %183 = math.tanh %182 : vector<4x32xf32>
    %cst_33 = arith.constant 1.000000e+00 : f32
    %184 = vector.broadcast %cst_33 : f32 to vector<4x32xf32>
    %185 = arith.subf %184, %176 : vector<4x32xf32>
    %186 = arith.mulf %185, %183 : vector<4x32xf32>
    %187 = arith.mulf %176, %158 : vector<4x32xf32>
    %188 = arith.addf %186, %187 : vector<4x32xf32>
    %189 = vector.extract_strided_slice %5 {offsets = [24, 0], sizes = [4, 96], strides = [1, 1]} : vector<32x96xf32> to vector<4x96xf32>
    %cst_34 = arith.constant dense<0.000000e+00> : vector<4x96xf32>
    %190 = tpu.matmul %188, %6, %cst_34 {dimension_numbers = #tpu.dot_dimension_numbers<[1], [0], [0], [1], [0, 0, 1, 1], [], []>} : vector<4x32xf32>, vector<32x96xf32>, vector<4x96xf32> -> vector<4x96xf32>
    %191 = vector.extract_strided_slice %189 {offsets = [0, 0], sizes = [4, 32], strides = [1, 1]} : vector<4x96xf32> to vector<4x32xf32>
    %192 = vector.extract_strided_slice %190 {offsets = [0, 0], sizes = [4, 32], strides = [1, 1]} : vector<4x96xf32> to vector<4x32xf32>
    %193 = arith.addf %191, %192 : vector<4x32xf32>
    %194 = arith.negf %193 : vector<4x32xf32>
    %195 = math.exp %194 : vector<4x32xf32>
    %cst_35 = arith.constant 1.000000e+00 : f32
    %196 = vector.broadcast %cst_35 : f32 to vector<4x32xf32>
    %197 = arith.addf %196, %195 : vector<4x32xf32>
    %198 = arith.divf %196, %197 : vector<4x32xf32>
    %199 = vector.extract_strided_slice %189 {offsets = [0, 32], sizes = [4, 32], strides = [1, 1]} : vector<4x96xf32> to vector<4x32xf32>
    %200 = vector.extract_strided_slice %190 {offsets = [0, 32], sizes = [4, 32], strides = [1, 1]} : vector<4x96xf32> to vector<4x32xf32>
    %201 = arith.addf %199, %200 : vector<4x32xf32>
    %202 = arith.negf %201 : vector<4x32xf32>
    %203 = math.exp %202 : vector<4x32xf32>
    %cst_36 = arith.constant 1.000000e+00 : f32
    %204 = vector.broadcast %cst_36 : f32 to vector<4x32xf32>
    %205 = arith.addf %204, %203 : vector<4x32xf32>
    %206 = arith.divf %204, %205 : vector<4x32xf32>
    %207 = vector.extract_strided_slice %189 {offsets = [0, 64], sizes = [4, 32], strides = [1, 1]} : vector<4x96xf32> to vector<4x32xf32>
    %208 = vector.extract_strided_slice %190 {offsets = [0, 64], sizes = [4, 32], strides = [1, 1]} : vector<4x96xf32> to vector<4x32xf32>
    %209 = vector.broadcast %7 : vector<1x32xf32> to vector<4x32xf32>
    %210 = arith.addf %208, %209 : vector<4x32xf32>
    %211 = arith.mulf %198, %210 : vector<4x32xf32>
    %212 = arith.addf %207, %211 : vector<4x32xf32>
    %213 = math.tanh %212 : vector<4x32xf32>
    %cst_37 = arith.constant 1.000000e+00 : f32
    %214 = vector.broadcast %cst_37 : f32 to vector<4x32xf32>
    %215 = arith.subf %214, %206 : vector<4x32xf32>
    %216 = arith.mulf %215, %213 : vector<4x32xf32>
    %217 = arith.mulf %206, %188 : vector<4x32xf32>
    %218 = arith.addf %216, %217 : vector<4x32xf32>
    %219 = vector.extract_strided_slice %5 {offsets = [28, 0], sizes = [4, 96], strides = [1, 1]} : vector<32x96xf32> to vector<4x96xf32>
    %cst_38 = arith.constant dense<0.000000e+00> : vector<4x96xf32>
    %220 = tpu.matmul %218, %6, %cst_38 {dimension_numbers = #tpu.dot_dimension_numbers<[1], [0], [0], [1], [0, 0, 1, 1], [], []>} : vector<4x32xf32>, vector<32x96xf32>, vector<4x96xf32> -> vector<4x96xf32>
    %221 = vector.extract_strided_slice %219 {offsets = [0, 0], sizes = [4, 32], strides = [1, 1]} : vector<4x96xf32> to vector<4x32xf32>
    %222 = vector.extract_strided_slice %220 {offsets = [0, 0], sizes = [4, 32], strides = [1, 1]} : vector<4x96xf32> to vector<4x32xf32>
    %223 = arith.addf %221, %222 : vector<4x32xf32>
    %224 = arith.negf %223 : vector<4x32xf32>
    %225 = math.exp %224 : vector<4x32xf32>
    %cst_39 = arith.constant 1.000000e+00 : f32
    %226 = vector.broadcast %cst_39 : f32 to vector<4x32xf32>
    %227 = arith.addf %226, %225 : vector<4x32xf32>
    %228 = arith.divf %226, %227 : vector<4x32xf32>
    %229 = vector.extract_strided_slice %219 {offsets = [0, 32], sizes = [4, 32], strides = [1, 1]} : vector<4x96xf32> to vector<4x32xf32>
    %230 = vector.extract_strided_slice %220 {offsets = [0, 32], sizes = [4, 32], strides = [1, 1]} : vector<4x96xf32> to vector<4x32xf32>
    %231 = arith.addf %229, %230 : vector<4x32xf32>
    %232 = arith.negf %231 : vector<4x32xf32>
    %233 = math.exp %232 : vector<4x32xf32>
    %cst_40 = arith.constant 1.000000e+00 : f32
    %234 = vector.broadcast %cst_40 : f32 to vector<4x32xf32>
    %235 = arith.addf %234, %233 : vector<4x32xf32>
    %236 = arith.divf %234, %235 : vector<4x32xf32>
    %237 = vector.extract_strided_slice %219 {offsets = [0, 64], sizes = [4, 32], strides = [1, 1]} : vector<4x96xf32> to vector<4x32xf32>
    %238 = vector.extract_strided_slice %220 {offsets = [0, 64], sizes = [4, 32], strides = [1, 1]} : vector<4x96xf32> to vector<4x32xf32>
    %239 = vector.broadcast %7 : vector<1x32xf32> to vector<4x32xf32>
    %240 = arith.addf %238, %239 : vector<4x32xf32>
    %241 = arith.mulf %228, %240 : vector<4x32xf32>
    %242 = arith.addf %237, %241 : vector<4x32xf32>
    %243 = math.tanh %242 : vector<4x32xf32>
    %cst_41 = arith.constant 1.000000e+00 : f32
    %244 = vector.broadcast %cst_41 : f32 to vector<4x32xf32>
    %245 = arith.subf %244, %236 : vector<4x32xf32>
    %246 = arith.mulf %245, %243 : vector<4x32xf32>
    %247 = arith.mulf %236, %218 : vector<4x32xf32>
    %248 = arith.addf %246, %247 : vector<4x32xf32>
    %249 = tpu.concatenate %38, %68, %98, %128, %158, %188, %218, %248 in 0 : vector<4x32xf32>, vector<4x32xf32>, vector<4x32xf32>, vector<4x32xf32>, vector<4x32xf32>, vector<4x32xf32>, vector<4x32xf32>, vector<4x32xf32> -> vector<32x32xf32>
    %c0_42 = arith.constant 0 : index
    %c0_43 = arith.constant 0 : index
    %250 = vector.load %arg6[%c0_42, %c0_43] : memref<32x96xf32, #tpu.memory_space<vmem>>, vector<32x96xf32>
    %cst_44 = arith.constant dense<0.000000e+00> : vector<32x96xf32>
    %251 = tpu.matmul %249, %250, %cst_44 {dimension_numbers = #tpu.dot_dimension_numbers<[1], [0], [0], [1], [0, 0, 1, 1], [], []>} : vector<32x32xf32>, vector<32x96xf32>, vector<32x96xf32> -> vector<32x96xf32>
    %c0_45 = arith.constant 0 : index
    %c0_46 = arith.constant 0 : index
    %252 = vector.load %arg8[%c0_45, %c0_46] : memref<1x96xf32, #tpu.memory_space<vmem>>, vector<1x96xf32>
    %253 = vector.broadcast %252 : vector<1x96xf32> to vector<32x96xf32>
    %254 = arith.addf %251, %253 : vector<32x96xf32>
    %c0_47 = arith.constant 0 : index
    %c0_48 = arith.constant 0 : index
    %255 = vector.load %arg7[%c0_47, %c0_48] : memref<32x96xf32, #tpu.memory_space<vmem>>, vector<32x96xf32>
    %c0_49 = arith.constant 0 : index
    %c0_50 = arith.constant 0 : index
    %256 = vector.load %arg9[%c0_49, %c0_50] : memref<1x32xf32, #tpu.memory_space<vmem>>, vector<1x32xf32>
    %cst_51 = arith.constant 0.000000e+00 : f32
    %257 = vector.broadcast %cst_51 : f32 to vector<4x32xf32>
    %258 = vector.extract_strided_slice %254 {offsets = [0, 0], sizes = [4, 96], strides = [1, 1]} : vector<32x96xf32> to vector<4x96xf32>
    %cst_52 = arith.constant dense<0.000000e+00> : vector<4x96xf32>
    %259 = tpu.matmul %257, %255, %cst_52 {dimension_numbers = #tpu.dot_dimension_numbers<[1], [0], [0], [1], [0, 0, 1, 1], [], []>} : vector<4x32xf32>, vector<32x96xf32>, vector<4x96xf32> -> vector<4x96xf32>
    %260 = vector.extract_strided_slice %258 {offsets = [0, 0], sizes = [4, 32], strides = [1, 1]} : vector<4x96xf32> to vector<4x32xf32>
    %261 = vector.extract_strided_slice %259 {offsets = [0, 0], sizes = [4, 32], strides = [1, 1]} : vector<4x96xf32> to vector<4x32xf32>
    %262 = arith.addf %260, %261 : vector<4x32xf32>
    %263 = arith.negf %262 : vector<4x32xf32>
    %264 = math.exp %263 : vector<4x32xf32>
    %cst_53 = arith.constant 1.000000e+00 : f32
    %265 = vector.broadcast %cst_53 : f32 to vector<4x32xf32>
    %266 = arith.addf %265, %264 : vector<4x32xf32>
    %267 = arith.divf %265, %266 : vector<4x32xf32>
    %268 = vector.extract_strided_slice %258 {offsets = [0, 32], sizes = [4, 32], strides = [1, 1]} : vector<4x96xf32> to vector<4x32xf32>
    %269 = vector.extract_strided_slice %259 {offsets = [0, 32], sizes = [4, 32], strides = [1, 1]} : vector<4x96xf32> to vector<4x32xf32>
    %270 = arith.addf %268, %269 : vector<4x32xf32>
    %271 = arith.negf %270 : vector<4x32xf32>
    %272 = math.exp %271 : vector<4x32xf32>
    %cst_54 = arith.constant 1.000000e+00 : f32
    %273 = vector.broadcast %cst_54 : f32 to vector<4x32xf32>
    %274 = arith.addf %273, %272 : vector<4x32xf32>
    %275 = arith.divf %273, %274 : vector<4x32xf32>
    %276 = vector.extract_strided_slice %258 {offsets = [0, 64], sizes = [4, 32], strides = [1, 1]} : vector<4x96xf32> to vector<4x32xf32>
    %277 = vector.extract_strided_slice %259 {offsets = [0, 64], sizes = [4, 32], strides = [1, 1]} : vector<4x96xf32> to vector<4x32xf32>
    %278 = vector.broadcast %256 : vector<1x32xf32> to vector<4x32xf32>
    %279 = arith.addf %277, %278 : vector<4x32xf32>
    %280 = arith.mulf %267, %279 : vector<4x32xf32>
    %281 = arith.addf %276, %280 : vector<4x32xf32>
    %282 = math.tanh %281 : vector<4x32xf32>
    %cst_55 = arith.constant 1.000000e+00 : f32
    %283 = vector.broadcast %cst_55 : f32 to vector<4x32xf32>
    %284 = arith.subf %283, %275 : vector<4x32xf32>
    %285 = arith.mulf %284, %282 : vector<4x32xf32>
    %286 = arith.mulf %275, %257 : vector<4x32xf32>
    %287 = arith.addf %285, %286 : vector<4x32xf32>
    %288 = vector.extract_strided_slice %254 {offsets = [4, 0], sizes = [4, 96], strides = [1, 1]} : vector<32x96xf32> to vector<4x96xf32>
    %cst_56 = arith.constant dense<0.000000e+00> : vector<4x96xf32>
    %289 = tpu.matmul %287, %255, %cst_56 {dimension_numbers = #tpu.dot_dimension_numbers<[1], [0], [0], [1], [0, 0, 1, 1], [], []>} : vector<4x32xf32>, vector<32x96xf32>, vector<4x96xf32> -> vector<4x96xf32>
    %290 = vector.extract_strided_slice %288 {offsets = [0, 0], sizes = [4, 32], strides = [1, 1]} : vector<4x96xf32> to vector<4x32xf32>
    %291 = vector.extract_strided_slice %289 {offsets = [0, 0], sizes = [4, 32], strides = [1, 1]} : vector<4x96xf32> to vector<4x32xf32>
    %292 = arith.addf %290, %291 : vector<4x32xf32>
    %293 = arith.negf %292 : vector<4x32xf32>
    %294 = math.exp %293 : vector<4x32xf32>
    %cst_57 = arith.constant 1.000000e+00 : f32
    %295 = vector.broadcast %cst_57 : f32 to vector<4x32xf32>
    %296 = arith.addf %295, %294 : vector<4x32xf32>
    %297 = arith.divf %295, %296 : vector<4x32xf32>
    %298 = vector.extract_strided_slice %288 {offsets = [0, 32], sizes = [4, 32], strides = [1, 1]} : vector<4x96xf32> to vector<4x32xf32>
    %299 = vector.extract_strided_slice %289 {offsets = [0, 32], sizes = [4, 32], strides = [1, 1]} : vector<4x96xf32> to vector<4x32xf32>
    %300 = arith.addf %298, %299 : vector<4x32xf32>
    %301 = arith.negf %300 : vector<4x32xf32>
    %302 = math.exp %301 : vector<4x32xf32>
    %cst_58 = arith.constant 1.000000e+00 : f32
    %303 = vector.broadcast %cst_58 : f32 to vector<4x32xf32>
    %304 = arith.addf %303, %302 : vector<4x32xf32>
    %305 = arith.divf %303, %304 : vector<4x32xf32>
    %306 = vector.extract_strided_slice %288 {offsets = [0, 64], sizes = [4, 32], strides = [1, 1]} : vector<4x96xf32> to vector<4x32xf32>
    %307 = vector.extract_strided_slice %289 {offsets = [0, 64], sizes = [4, 32], strides = [1, 1]} : vector<4x96xf32> to vector<4x32xf32>
    %308 = vector.broadcast %256 : vector<1x32xf32> to vector<4x32xf32>
    %309 = arith.addf %307, %308 : vector<4x32xf32>
    %310 = arith.mulf %297, %309 : vector<4x32xf32>
    %311 = arith.addf %306, %310 : vector<4x32xf32>
    %312 = math.tanh %311 : vector<4x32xf32>
    %cst_59 = arith.constant 1.000000e+00 : f32
    %313 = vector.broadcast %cst_59 : f32 to vector<4x32xf32>
    %314 = arith.subf %313, %305 : vector<4x32xf32>
    %315 = arith.mulf %314, %312 : vector<4x32xf32>
    %316 = arith.mulf %305, %287 : vector<4x32xf32>
    %317 = arith.addf %315, %316 : vector<4x32xf32>
    %318 = vector.extract_strided_slice %254 {offsets = [8, 0], sizes = [4, 96], strides = [1, 1]} : vector<32x96xf32> to vector<4x96xf32>
    %cst_60 = arith.constant dense<0.000000e+00> : vector<4x96xf32>
    %319 = tpu.matmul %317, %255, %cst_60 {dimension_numbers = #tpu.dot_dimension_numbers<[1], [0], [0], [1], [0, 0, 1, 1], [], []>} : vector<4x32xf32>, vector<32x96xf32>, vector<4x96xf32> -> vector<4x96xf32>
    %320 = vector.extract_strided_slice %318 {offsets = [0, 0], sizes = [4, 32], strides = [1, 1]} : vector<4x96xf32> to vector<4x32xf32>
    %321 = vector.extract_strided_slice %319 {offsets = [0, 0], sizes = [4, 32], strides = [1, 1]} : vector<4x96xf32> to vector<4x32xf32>
    %322 = arith.addf %320, %321 : vector<4x32xf32>
    %323 = arith.negf %322 : vector<4x32xf32>
    %324 = math.exp %323 : vector<4x32xf32>
    %cst_61 = arith.constant 1.000000e+00 : f32
    %325 = vector.broadcast %cst_61 : f32 to vector<4x32xf32>
    %326 = arith.addf %325, %324 : vector<4x32xf32>
    %327 = arith.divf %325, %326 : vector<4x32xf32>
    %328 = vector.extract_strided_slice %318 {offsets = [0, 32], sizes = [4, 32], strides = [1, 1]} : vector<4x96xf32> to vector<4x32xf32>
    %329 = vector.extract_strided_slice %319 {offsets = [0, 32], sizes = [4, 32], strides = [1, 1]} : vector<4x96xf32> to vector<4x32xf32>
    %330 = arith.addf %328, %329 : vector<4x32xf32>
    %331 = arith.negf %330 : vector<4x32xf32>
    %332 = math.exp %331 : vector<4x32xf32>
    %cst_62 = arith.constant 1.000000e+00 : f32
    %333 = vector.broadcast %cst_62 : f32 to vector<4x32xf32>
    %334 = arith.addf %333, %332 : vector<4x32xf32>
    %335 = arith.divf %333, %334 : vector<4x32xf32>
    %336 = vector.extract_strided_slice %318 {offsets = [0, 64], sizes = [4, 32], strides = [1, 1]} : vector<4x96xf32> to vector<4x32xf32>
    %337 = vector.extract_strided_slice %319 {offsets = [0, 64], sizes = [4, 32], strides = [1, 1]} : vector<4x96xf32> to vector<4x32xf32>
    %338 = vector.broadcast %256 : vector<1x32xf32> to vector<4x32xf32>
    %339 = arith.addf %337, %338 : vector<4x32xf32>
    %340 = arith.mulf %327, %339 : vector<4x32xf32>
    %341 = arith.addf %336, %340 : vector<4x32xf32>
    %342 = math.tanh %341 : vector<4x32xf32>
    %cst_63 = arith.constant 1.000000e+00 : f32
    %343 = vector.broadcast %cst_63 : f32 to vector<4x32xf32>
    %344 = arith.subf %343, %335 : vector<4x32xf32>
    %345 = arith.mulf %344, %342 : vector<4x32xf32>
    %346 = arith.mulf %335, %317 : vector<4x32xf32>
    %347 = arith.addf %345, %346 : vector<4x32xf32>
    %348 = vector.extract_strided_slice %254 {offsets = [12, 0], sizes = [4, 96], strides = [1, 1]} : vector<32x96xf32> to vector<4x96xf32>
    %cst_64 = arith.constant dense<0.000000e+00> : vector<4x96xf32>
    %349 = tpu.matmul %347, %255, %cst_64 {dimension_numbers = #tpu.dot_dimension_numbers<[1], [0], [0], [1], [0, 0, 1, 1], [], []>} : vector<4x32xf32>, vector<32x96xf32>, vector<4x96xf32> -> vector<4x96xf32>
    %350 = vector.extract_strided_slice %348 {offsets = [0, 0], sizes = [4, 32], strides = [1, 1]} : vector<4x96xf32> to vector<4x32xf32>
    %351 = vector.extract_strided_slice %349 {offsets = [0, 0], sizes = [4, 32], strides = [1, 1]} : vector<4x96xf32> to vector<4x32xf32>
    %352 = arith.addf %350, %351 : vector<4x32xf32>
    %353 = arith.negf %352 : vector<4x32xf32>
    %354 = math.exp %353 : vector<4x32xf32>
    %cst_65 = arith.constant 1.000000e+00 : f32
    %355 = vector.broadcast %cst_65 : f32 to vector<4x32xf32>
    %356 = arith.addf %355, %354 : vector<4x32xf32>
    %357 = arith.divf %355, %356 : vector<4x32xf32>
    %358 = vector.extract_strided_slice %348 {offsets = [0, 32], sizes = [4, 32], strides = [1, 1]} : vector<4x96xf32> to vector<4x32xf32>
    %359 = vector.extract_strided_slice %349 {offsets = [0, 32], sizes = [4, 32], strides = [1, 1]} : vector<4x96xf32> to vector<4x32xf32>
    %360 = arith.addf %358, %359 : vector<4x32xf32>
    %361 = arith.negf %360 : vector<4x32xf32>
    %362 = math.exp %361 : vector<4x32xf32>
    %cst_66 = arith.constant 1.000000e+00 : f32
    %363 = vector.broadcast %cst_66 : f32 to vector<4x32xf32>
    %364 = arith.addf %363, %362 : vector<4x32xf32>
    %365 = arith.divf %363, %364 : vector<4x32xf32>
    %366 = vector.extract_strided_slice %348 {offsets = [0, 64], sizes = [4, 32], strides = [1, 1]} : vector<4x96xf32> to vector<4x32xf32>
    %367 = vector.extract_strided_slice %349 {offsets = [0, 64], sizes = [4, 32], strides = [1, 1]} : vector<4x96xf32> to vector<4x32xf32>
    %368 = vector.broadcast %256 : vector<1x32xf32> to vector<4x32xf32>
    %369 = arith.addf %367, %368 : vector<4x32xf32>
    %370 = arith.mulf %357, %369 : vector<4x32xf32>
    %371 = arith.addf %366, %370 : vector<4x32xf32>
    %372 = math.tanh %371 : vector<4x32xf32>
    %cst_67 = arith.constant 1.000000e+00 : f32
    %373 = vector.broadcast %cst_67 : f32 to vector<4x32xf32>
    %374 = arith.subf %373, %365 : vector<4x32xf32>
    %375 = arith.mulf %374, %372 : vector<4x32xf32>
    %376 = arith.mulf %365, %347 : vector<4x32xf32>
    %377 = arith.addf %375, %376 : vector<4x32xf32>
    %378 = vector.extract_strided_slice %254 {offsets = [16, 0], sizes = [4, 96], strides = [1, 1]} : vector<32x96xf32> to vector<4x96xf32>
    %cst_68 = arith.constant dense<0.000000e+00> : vector<4x96xf32>
    %379 = tpu.matmul %377, %255, %cst_68 {dimension_numbers = #tpu.dot_dimension_numbers<[1], [0], [0], [1], [0, 0, 1, 1], [], []>} : vector<4x32xf32>, vector<32x96xf32>, vector<4x96xf32> -> vector<4x96xf32>
    %380 = vector.extract_strided_slice %378 {offsets = [0, 0], sizes = [4, 32], strides = [1, 1]} : vector<4x96xf32> to vector<4x32xf32>
    %381 = vector.extract_strided_slice %379 {offsets = [0, 0], sizes = [4, 32], strides = [1, 1]} : vector<4x96xf32> to vector<4x32xf32>
    %382 = arith.addf %380, %381 : vector<4x32xf32>
    %383 = arith.negf %382 : vector<4x32xf32>
    %384 = math.exp %383 : vector<4x32xf32>
    %cst_69 = arith.constant 1.000000e+00 : f32
    %385 = vector.broadcast %cst_69 : f32 to vector<4x32xf32>
    %386 = arith.addf %385, %384 : vector<4x32xf32>
    %387 = arith.divf %385, %386 : vector<4x32xf32>
    %388 = vector.extract_strided_slice %378 {offsets = [0, 32], sizes = [4, 32], strides = [1, 1]} : vector<4x96xf32> to vector<4x32xf32>
    %389 = vector.extract_strided_slice %379 {offsets = [0, 32], sizes = [4, 32], strides = [1, 1]} : vector<4x96xf32> to vector<4x32xf32>
    %390 = arith.addf %388, %389 : vector<4x32xf32>
    %391 = arith.negf %390 : vector<4x32xf32>
    %392 = math.exp %391 : vector<4x32xf32>
    %cst_70 = arith.constant 1.000000e+00 : f32
    %393 = vector.broadcast %cst_70 : f32 to vector<4x32xf32>
    %394 = arith.addf %393, %392 : vector<4x32xf32>
    %395 = arith.divf %393, %394 : vector<4x32xf32>
    %396 = vector.extract_strided_slice %378 {offsets = [0, 64], sizes = [4, 32], strides = [1, 1]} : vector<4x96xf32> to vector<4x32xf32>
    %397 = vector.extract_strided_slice %379 {offsets = [0, 64], sizes = [4, 32], strides = [1, 1]} : vector<4x96xf32> to vector<4x32xf32>
    %398 = vector.broadcast %256 : vector<1x32xf32> to vector<4x32xf32>
    %399 = arith.addf %397, %398 : vector<4x32xf32>
    %400 = arith.mulf %387, %399 : vector<4x32xf32>
    %401 = arith.addf %396, %400 : vector<4x32xf32>
    %402 = math.tanh %401 : vector<4x32xf32>
    %cst_71 = arith.constant 1.000000e+00 : f32
    %403 = vector.broadcast %cst_71 : f32 to vector<4x32xf32>
    %404 = arith.subf %403, %395 : vector<4x32xf32>
    %405 = arith.mulf %404, %402 : vector<4x32xf32>
    %406 = arith.mulf %395, %377 : vector<4x32xf32>
    %407 = arith.addf %405, %406 : vector<4x32xf32>
    %408 = vector.extract_strided_slice %254 {offsets = [20, 0], sizes = [4, 96], strides = [1, 1]} : vector<32x96xf32> to vector<4x96xf32>
    %cst_72 = arith.constant dense<0.000000e+00> : vector<4x96xf32>
    %409 = tpu.matmul %407, %255, %cst_72 {dimension_numbers = #tpu.dot_dimension_numbers<[1], [0], [0], [1], [0, 0, 1, 1], [], []>} : vector<4x32xf32>, vector<32x96xf32>, vector<4x96xf32> -> vector<4x96xf32>
    %410 = vector.extract_strided_slice %408 {offsets = [0, 0], sizes = [4, 32], strides = [1, 1]} : vector<4x96xf32> to vector<4x32xf32>
    %411 = vector.extract_strided_slice %409 {offsets = [0, 0], sizes = [4, 32], strides = [1, 1]} : vector<4x96xf32> to vector<4x32xf32>
    %412 = arith.addf %410, %411 : vector<4x32xf32>
    %413 = arith.negf %412 : vector<4x32xf32>
    %414 = math.exp %413 : vector<4x32xf32>
    %cst_73 = arith.constant 1.000000e+00 : f32
    %415 = vector.broadcast %cst_73 : f32 to vector<4x32xf32>
    %416 = arith.addf %415, %414 : vector<4x32xf32>
    %417 = arith.divf %415, %416 : vector<4x32xf32>
    %418 = vector.extract_strided_slice %408 {offsets = [0, 32], sizes = [4, 32], strides = [1, 1]} : vector<4x96xf32> to vector<4x32xf32>
    %419 = vector.extract_strided_slice %409 {offsets = [0, 32], sizes = [4, 32], strides = [1, 1]} : vector<4x96xf32> to vector<4x32xf32>
    %420 = arith.addf %418, %419 : vector<4x32xf32>
    %421 = arith.negf %420 : vector<4x32xf32>
    %422 = math.exp %421 : vector<4x32xf32>
    %cst_74 = arith.constant 1.000000e+00 : f32
    %423 = vector.broadcast %cst_74 : f32 to vector<4x32xf32>
    %424 = arith.addf %423, %422 : vector<4x32xf32>
    %425 = arith.divf %423, %424 : vector<4x32xf32>
    %426 = vector.extract_strided_slice %408 {offsets = [0, 64], sizes = [4, 32], strides = [1, 1]} : vector<4x96xf32> to vector<4x32xf32>
    %427 = vector.extract_strided_slice %409 {offsets = [0, 64], sizes = [4, 32], strides = [1, 1]} : vector<4x96xf32> to vector<4x32xf32>
    %428 = vector.broadcast %256 : vector<1x32xf32> to vector<4x32xf32>
    %429 = arith.addf %427, %428 : vector<4x32xf32>
    %430 = arith.mulf %417, %429 : vector<4x32xf32>
    %431 = arith.addf %426, %430 : vector<4x32xf32>
    %432 = math.tanh %431 : vector<4x32xf32>
    %cst_75 = arith.constant 1.000000e+00 : f32
    %433 = vector.broadcast %cst_75 : f32 to vector<4x32xf32>
    %434 = arith.subf %433, %425 : vector<4x32xf32>
    %435 = arith.mulf %434, %432 : vector<4x32xf32>
    %436 = arith.mulf %425, %407 : vector<4x32xf32>
    %437 = arith.addf %435, %436 : vector<4x32xf32>
    %438 = vector.extract_strided_slice %254 {offsets = [24, 0], sizes = [4, 96], strides = [1, 1]} : vector<32x96xf32> to vector<4x96xf32>
    %cst_76 = arith.constant dense<0.000000e+00> : vector<4x96xf32>
    %439 = tpu.matmul %437, %255, %cst_76 {dimension_numbers = #tpu.dot_dimension_numbers<[1], [0], [0], [1], [0, 0, 1, 1], [], []>} : vector<4x32xf32>, vector<32x96xf32>, vector<4x96xf32> -> vector<4x96xf32>
    %440 = vector.extract_strided_slice %438 {offsets = [0, 0], sizes = [4, 32], strides = [1, 1]} : vector<4x96xf32> to vector<4x32xf32>
    %441 = vector.extract_strided_slice %439 {offsets = [0, 0], sizes = [4, 32], strides = [1, 1]} : vector<4x96xf32> to vector<4x32xf32>
    %442 = arith.addf %440, %441 : vector<4x32xf32>
    %443 = arith.negf %442 : vector<4x32xf32>
    %444 = math.exp %443 : vector<4x32xf32>
    %cst_77 = arith.constant 1.000000e+00 : f32
    %445 = vector.broadcast %cst_77 : f32 to vector<4x32xf32>
    %446 = arith.addf %445, %444 : vector<4x32xf32>
    %447 = arith.divf %445, %446 : vector<4x32xf32>
    %448 = vector.extract_strided_slice %438 {offsets = [0, 32], sizes = [4, 32], strides = [1, 1]} : vector<4x96xf32> to vector<4x32xf32>
    %449 = vector.extract_strided_slice %439 {offsets = [0, 32], sizes = [4, 32], strides = [1, 1]} : vector<4x96xf32> to vector<4x32xf32>
    %450 = arith.addf %448, %449 : vector<4x32xf32>
    %451 = arith.negf %450 : vector<4x32xf32>
    %452 = math.exp %451 : vector<4x32xf32>
    %cst_78 = arith.constant 1.000000e+00 : f32
    %453 = vector.broadcast %cst_78 : f32 to vector<4x32xf32>
    %454 = arith.addf %453, %452 : vector<4x32xf32>
    %455 = arith.divf %453, %454 : vector<4x32xf32>
    %456 = vector.extract_strided_slice %438 {offsets = [0, 64], sizes = [4, 32], strides = [1, 1]} : vector<4x96xf32> to vector<4x32xf32>
    %457 = vector.extract_strided_slice %439 {offsets = [0, 64], sizes = [4, 32], strides = [1, 1]} : vector<4x96xf32> to vector<4x32xf32>
    %458 = vector.broadcast %256 : vector<1x32xf32> to vector<4x32xf32>
    %459 = arith.addf %457, %458 : vector<4x32xf32>
    %460 = arith.mulf %447, %459 : vector<4x32xf32>
    %461 = arith.addf %456, %460 : vector<4x32xf32>
    %462 = math.tanh %461 : vector<4x32xf32>
    %cst_79 = arith.constant 1.000000e+00 : f32
    %463 = vector.broadcast %cst_79 : f32 to vector<4x32xf32>
    %464 = arith.subf %463, %455 : vector<4x32xf32>
    %465 = arith.mulf %464, %462 : vector<4x32xf32>
    %466 = arith.mulf %455, %437 : vector<4x32xf32>
    %467 = arith.addf %465, %466 : vector<4x32xf32>
    %468 = vector.extract_strided_slice %254 {offsets = [28, 0], sizes = [4, 96], strides = [1, 1]} : vector<32x96xf32> to vector<4x96xf32>
    %cst_80 = arith.constant dense<0.000000e+00> : vector<4x96xf32>
    %469 = tpu.matmul %467, %255, %cst_80 {dimension_numbers = #tpu.dot_dimension_numbers<[1], [0], [0], [1], [0, 0, 1, 1], [], []>} : vector<4x32xf32>, vector<32x96xf32>, vector<4x96xf32> -> vector<4x96xf32>
    %470 = vector.extract_strided_slice %468 {offsets = [0, 0], sizes = [4, 32], strides = [1, 1]} : vector<4x96xf32> to vector<4x32xf32>
    %471 = vector.extract_strided_slice %469 {offsets = [0, 0], sizes = [4, 32], strides = [1, 1]} : vector<4x96xf32> to vector<4x32xf32>
    %472 = arith.addf %470, %471 : vector<4x32xf32>
    %473 = arith.negf %472 : vector<4x32xf32>
    %474 = math.exp %473 : vector<4x32xf32>
    %cst_81 = arith.constant 1.000000e+00 : f32
    %475 = vector.broadcast %cst_81 : f32 to vector<4x32xf32>
    %476 = arith.addf %475, %474 : vector<4x32xf32>
    %477 = arith.divf %475, %476 : vector<4x32xf32>
    %478 = vector.extract_strided_slice %468 {offsets = [0, 32], sizes = [4, 32], strides = [1, 1]} : vector<4x96xf32> to vector<4x32xf32>
    %479 = vector.extract_strided_slice %469 {offsets = [0, 32], sizes = [4, 32], strides = [1, 1]} : vector<4x96xf32> to vector<4x32xf32>
    %480 = arith.addf %478, %479 : vector<4x32xf32>
    %481 = arith.negf %480 : vector<4x32xf32>
    %482 = math.exp %481 : vector<4x32xf32>
    %cst_82 = arith.constant 1.000000e+00 : f32
    %483 = vector.broadcast %cst_82 : f32 to vector<4x32xf32>
    %484 = arith.addf %483, %482 : vector<4x32xf32>
    %485 = arith.divf %483, %484 : vector<4x32xf32>
    %486 = vector.extract_strided_slice %468 {offsets = [0, 64], sizes = [4, 32], strides = [1, 1]} : vector<4x96xf32> to vector<4x32xf32>
    %487 = vector.extract_strided_slice %469 {offsets = [0, 64], sizes = [4, 32], strides = [1, 1]} : vector<4x96xf32> to vector<4x32xf32>
    %488 = vector.broadcast %256 : vector<1x32xf32> to vector<4x32xf32>
    %489 = arith.addf %487, %488 : vector<4x32xf32>
    %490 = arith.mulf %477, %489 : vector<4x32xf32>
    %491 = arith.addf %486, %490 : vector<4x32xf32>
    %492 = math.tanh %491 : vector<4x32xf32>
    %cst_83 = arith.constant 1.000000e+00 : f32
    %493 = vector.broadcast %cst_83 : f32 to vector<4x32xf32>
    %494 = arith.subf %493, %485 : vector<4x32xf32>
    %495 = arith.mulf %494, %492 : vector<4x32xf32>
    %496 = arith.mulf %485, %467 : vector<4x32xf32>
    %497 = arith.addf %495, %496 : vector<4x32xf32>
    %498 = tpu.concatenate %287, %317, %347, %377, %407, %437, %467, %497 in 0 : vector<4x32xf32>, vector<4x32xf32>, vector<4x32xf32>, vector<4x32xf32>, vector<4x32xf32>, vector<4x32xf32>, vector<4x32xf32>, vector<4x32xf32> -> vector<32x32xf32>
    %c0_84 = arith.constant 0 : index
    %c0_85 = arith.constant 0 : index
    %499 = vector.load %arg10[%c0_84, %c0_85] : memref<32x32xf32, #tpu.memory_space<vmem>>, vector<32x32xf32>
    %cst_86 = arith.constant dense<0.000000e+00> : vector<32x32xf32>
    %500 = tpu.matmul %498, %499, %cst_86 {dimension_numbers = #tpu.dot_dimension_numbers<[1], [0], [0], [1], [0, 0, 1, 1], [], []>} : vector<32x32xf32>, vector<32x32xf32>, vector<32x32xf32> -> vector<32x32xf32>
    %c0_87 = arith.constant 0 : index
    %c0_88 = arith.constant 0 : index
    %501 = vector.load %arg11[%c0_87, %c0_88] : memref<1x32xf32, #tpu.memory_space<vmem>>, vector<1x32xf32>
    %502 = vector.broadcast %501 : vector<1x32xf32> to vector<32x32xf32>
    %503 = arith.addf %500, %502 : vector<32x32xf32>
    %504 = arith.negf %503 : vector<32x32xf32>
    %505 = math.exp %504 : vector<32x32xf32>
    %cst_89 = arith.constant 1.000000e+00 : f32
    %506 = vector.broadcast %cst_89 : f32 to vector<32x32xf32>
    %507 = arith.addf %506, %505 : vector<32x32xf32>
    %508 = arith.divf %506, %507 : vector<32x32xf32>
    %c0_90 = arith.constant 0 : index
    %c0_91 = arith.constant 0 : index
    %509 = vector.load %arg12[%c0_90, %c0_91] : memref<32x32xf32, #tpu.memory_space<vmem>>, vector<32x32xf32>
    tpu.vector_store %arg12[%c0_90, %c0_91], %508 {strides = array<i32>} : memref<32x32xf32, #tpu.memory_space<vmem>>, vector<32x32xf32>,
    return
  }
  func.func @transform_0(%arg0: i32) -> (i32, i32) {
    %c0_i32 = arith.constant 0 : i32
    %c0_i32_0 = arith.constant 0 : i32
    %c0_i32_1 = arith.constant 0 : i32
    return %c0_i32, %c0_i32_0 : i32, i32
  }
  func.func @transform_1(%arg0: i32) -> (i32, i32) {
    %c0_i32 = arith.constant 0 : i32
    %c0_i32_0 = arith.constant 0 : i32
    %c0_i32_1 = arith.constant 0 : i32
    return %c0_i32, %c0_i32_0 : i32, i32
  }
  func.func @transform_2(%arg0: i32) -> (i32, i32) {
    %c0_i32 = arith.constant 0 : i32
    %c0_i32_0 = arith.constant 0 : i32
    %c0_i32_1 = arith.constant 0 : i32
    return %c0_i32, %c0_i32_0 : i32, i32
  }
  func.func @transform_3(%arg0: i32) -> (i32, i32) {
    %c0_i32 = arith.constant 0 : i32
    %c0_i32_0 = arith.constant 0 : i32
    %c0_i32_1 = arith.constant 0 : i32
    return %c0_i32, %c0_i32_0 : i32, i32
  }
  func.func @transform_4(%arg0: i32) -> (i32, i32) {
    %c0_i32 = arith.constant 0 : i32
    %c0_i32_0 = arith.constant 0 : i32
    %c0_i32_1 = arith.constant 0 : i32
    return %c0_i32, %c0_i32_0 : i32, i32
  }
  func.func @transform_5(%arg0: i32) -> (i32, i32) {
    %c0_i32 = arith.constant 0 : i32
    %c0_i32_0 = arith.constant 0 : i32
    %c0_i32_1 = arith.constant 0 : i32
    return %c0_i32, %c0_i32_0 : i32, i32
  }
  func.func @transform_6(%arg0: i32) -> (i32, i32) {
    %c0_i32 = arith.constant 0 : i32
    %c0_i32_0 = arith.constant 0 : i32
    %c0_i32_1 = arith.constant 0 : i32
    return %c0_i32, %c0_i32_0 : i32, i32
  }
  func.func @transform_7(%arg0: i32) -> (i32, i32) {
    %c0_i32 = arith.constant 0 : i32
    %c0_i32_0 = arith.constant 0 : i32
    %c0_i32_1 = arith.constant 0 : i32
    return %c0_i32, %c0_i32_0 : i32, i32
  }
  func.func @transform_8(%arg0: i32) -> (i32, i32) {
    %c0_i32 = arith.constant 0 : i32
    %c0_i32_0 = arith.constant 0 : i32
    %c0_i32_1 = arith.constant 0 : i32
    return %c0_i32, %c0_i32_0 : i32, i32
  }
  func.func @transform_9(%arg0: i32) -> (i32, i32) {
    %c0_i32 = arith.constant 0 : i32
    %c0_i32_0 = arith.constant 0 : i32
    %c0_i32_1 = arith.constant 0 : i32
    return %c0_i32, %c0_i32_0 : i32, i32
  }
  func.func @transform_10(%arg0: i32) -> (i32, i32) {
    %c0_i32 = arith.constant 0 : i32
    %c0_i32_0 = arith.constant 0 : i32
    %c0_i32_1 = arith.constant 0 : i32
    return %c0_i32, %c0_i32_0 : i32, i32
  }
  func.func @transform_11(%arg0: i32) -> (i32, i32) {
    %c0_i32 = arith.constant 0 : i32
    %c0_i32_0 = arith.constant 0 : i32
    %c0_i32_1 = arith.constant 0 : i32
    return %c0_i32, %c0_i32_0 : i32, i32
  }
}

</mosaic_0001>

<llo_original>
// kernel: _supervisor_forward.1
$region0: #{_supervisor_forward.1}
  #allocation0 [shape = 'u32[]', space=smem, size = 0x4, offset = 0x4, fixed_abs, tag = 'smem constant byte address 0x4 - core index']
  #allocation1 [shape = 'u32[144,128]{1,0:T(1,128)}', space=vmem, size = 0x12000, scoped, tag = 'internal scratch']
  %s0 = inlined_call_operand.vmem [shape: f32[32,32], index: 0, kind: input, shape index: {}]
  %s1 = inlined_call_operand.vmem [shape: f32[32,96], index: 1, kind: input, shape index: {}]
  %s2 = inlined_call_operand.vmem [shape: f32[32,96], index: 2, kind: input, shape index: {}]
  %s3 = inlined_call_operand.vmem [shape: f32[1,96], index: 3, kind: input, shape index: {}]
  %s4 = inlined_call_operand.vmem [shape: f32[1,32], index: 4, kind: input, shape index: {}]
  %s5 = inlined_call_operand.vmem [shape: f32[32,96], index: 5, kind: input, shape index: {}]
  %s6 = inlined_call_operand.vmem [shape: f32[32,96], index: 6, kind: input, shape index: {}]
  %s7 = inlined_call_operand.vmem [shape: f32[1,96], index: 7, kind: input, shape index: {}]
  %s8 = inlined_call_operand.vmem [shape: f32[1,32], index: 8, kind: input, shape index: {}]
  %s9 = inlined_call_operand.vmem [shape: f32[32,32], index: 9, kind: input, shape index: {}]
  %s10 = inlined_call_operand.vmem [shape: f32[1,32], index: 10, kind: input, shape index: {}]
  %s11 = inlined_call_operand.vmem [shape: f32[32,32], index: 11, kind: output, shape index: {}]
  %s12 = sld [smem:[#allocation0]]
  $region54: #{_supervisor_forward.1} parent=0
    _
  %s14 = ssub.s32 1, %s12
  %s15 = scalar_select 0, %s14, %s12
  // Predicated region
  $region2: #{_supervisor_forward.1} parent=0 // pred_check
    _
  $region3: #{_supervisor_forward.1} parent=0 // pred_check_branch
    %17 = sbr.rel (0) target = $region5
  $region4: #{_supervisor_forward.1} parent=0 // pred_region
    _
  $region5: #{_supervisor_forward.1} parent=0 // pred_fallthru
    _
  // Predicated region
  $region6: #{_supervisor_forward.1} parent=0 // pred_check
    _
  $region7: #{_supervisor_forward.1} parent=0 // pred_check_branch
    %19 = sbr.rel (0) target = $region9
  $region8: #{_supervisor_forward.1} parent=0 // pred_region
    _
  $region9: #{_supervisor_forward.1} parent=0 // pred_fallthru
    _
  // Predicated region
  $region10: #{_supervisor_forward.1} parent=0 // pred_check
    _
  $region11: #{_supervisor_forward.1} parent=0 // pred_check_branch
    %21 = sbr.rel (0) target = $region13
  $region12: #{_supervisor_forward.1} parent=0 // pred_region
    _
  $region13: #{_supervisor_forward.1} parent=0 // pred_fallthru
    _
  // Predicated region
  $region14: #{_supervisor_forward.1} parent=0 // pred_check
    _
  $region15: #{_supervisor_forward.1} parent=0 // pred_check_branch
    %23 = sbr.rel (0) target = $region17
  $region16: #{_supervisor_forward.1} parent=0 // pred_region
    _
  $region17: #{_supervisor_forward.1} parent=0 // pred_fallthru
    _
  // Predicated region
  $region18: #{_supervisor_forward.1} parent=0 // pred_check
    _
  $region19: #{_supervisor_forward.1} parent=0 // pred_check_branch
    %25 = sbr.rel (0) target = $region21
  $region20: #{_supervisor_forward.1} parent=0 // pred_region
    _
  $region21: #{_supervisor_forward.1} parent=0 // pred_fallthru
    _
  // Predicated region
  $region22: #{_supervisor_forward.1} parent=0 // pred_check
    _
  $region23: #{_supervisor_forward.1} parent=0 // pred_check_branch
    %27 = sbr.rel (0) target = $region25
  $region24: #{_supervisor_forward.1} parent=0 // pred_region
    _
  $region25: #{_supervisor_forward.1} parent=0 // pred_fallthru
    _
  // Predicated region
  $region26: #{_supervisor_forward.1} parent=0 // pred_check
    _
  $region27: #{_supervisor_forward.1} parent=0 // pred_check_branch
    %29 = sbr.rel (0) target = $region29
  $region28: #{_supervisor_forward.1} parent=0 // pred_region
    _
  $region29: #{_supervisor_forward.1} parent=0 // pred_fallthru
    _
  // Predicated region
  $region30: #{_supervisor_forward.1} parent=0 // pred_check
    _
  $region31: #{_supervisor_forward.1} parent=0 // pred_check_branch
    %31 = sbr.rel (0) target = $region33
  $region32: #{_supervisor_forward.1} parent=0 // pred_region
    _
  $region33: #{_supervisor_forward.1} parent=0 // pred_fallthru
    _
  // Predicated region
  $region34: #{_supervisor_forward.1} parent=0 // pred_check
    _
  $region35: #{_supervisor_forward.1} parent=0 // pred_check_branch
    %33 = sbr.rel (0) target = $region37
  $region36: #{_supervisor_forward.1} parent=0 // pred_region
    _
  $region37: #{_supervisor_forward.1} parent=0 // pred_fallthru
    _
  // Predicated region
  $region38: #{_supervisor_forward.1} parent=0 // pred_check
    _
  $region39: #{_supervisor_forward.1} parent=0 // pred_check_branch
    %35 = sbr.rel (0) target = $region41
  $region40: #{_supervisor_forward.1} parent=0 // pred_region
    _
  $region41: #{_supervisor_forward.1} parent=0 // pred_fallthru
    _
  // Predicated region
  $region42: #{_supervisor_forward.1} parent=0 // pred_check
    _
  $region43: #{_supervisor_forward.1} parent=0 // pred_check_branch
    %37 = sbr.rel (0) target = $region45
  $region44: #{_supervisor_forward.1} parent=0 // pred_region
    _
  $region45: #{_supervisor_forward.1} parent=0 // pred_fallthru
    _
  %v38 = vld [vmem:[%s0] sm:$0xff]
  %v39 = vld [vmem:[%s0 + $0x8] sm:$0xff]
  %v40 = vld [vmem:[%s0 + $0x10] sm:$0xff]
  %v41 = vld [vmem:[%s0 + $0x18] sm:$0xff]
  %v42 = vld [vmem:[%s1] sm:$0xff]
  %v43 = vld [vmem:[%s1 + $0x8] sm:$0xff]
  %v44 = vld [vmem:[%s1 + $0x10] sm:$0xff]
  %v45 = vld [vmem:[%s1 + $0x18] sm:$0xff]
  %v46 = vld [vmem:[%s3] sm:$0x1]
  %v48 = vlaneseq
  %v49 = vshrl.u32 %v48, 7
  %v50 = vsub.s32 0, %v49
  %v51 = vrot.slane %v46, %v50
  %vm53 = vcmask 261120
  %v55 = vsel %vm53, %v38, 0
  %v58 = vsel %vm53, %v39, 0
  %v61 = vsel %vm53, %v40, 0
  %v64 = vsel %vm53, %v41, 0
  %66 = vmatprep.subr.mxu0 0.0
  %67 = vmatpush1.msra.mxu0 %v42
  %68 = vmatprep.subr.mxu0 0.0
  %69 = vmatpush1.msra.mxu0 %v43
  %70 = vmatprep.subr.mxu0 0.0
  %71 = vmatpush1.msra.mxu0 %v44
  %72 = vmatprep.subr.mxu0 0.0
  %73 = vmatpush1.msra.mxu0 %v45
  %74 = vmatprep.subr.mxu0 0.0
  %75 = vmatpush1.msra.mxu0 0.0
  %76 = vmatprep.subr.mxu0 0.0
  %77 = vmatpush1.msra.mxu0 0.0
  %78 = vmatprep.subr.mxu0 0.0
  %79 = vmatpush1.msra.mxu0 0.0
  %80 = vmatprep.subr.mxu0 0.0
  %81 = vmatpush1.msra.mxu0 0.0
  %82 = vmatprep.subr.mxu0 0.0
  %83 = vmatpush1.msra.mxu0 0.0
  %84 = vmatprep.subr.mxu0 0.0
  %85 = vmatpush1.msra.mxu0 0.0
  %86 = vmatprep.subr.mxu0 0.0
  %87 = vmatpush1.msra.mxu0 0.0
  %88 = vmatprep.subr.mxu0 0.0
  %89 = vmatpush1.msra.mxu0 0.0
  %90 = vmatprep.subr.mxu0 0.0
  %91 = vmatpush1.msra.mxu0 0.0
  %92 = vmatprep.subr.mxu0 0.0
  %93 = vmatpush1.msra.mxu0 0.0
  %94 = vmatprep.subr.mxu0 0.0
  %95 = vmatpush1.msra.mxu0 0.0
  %96 = vmatprep.subr.mxu0 0.0
  %97 = vmatpush1.msra.mxu0 0.0
  %98 = vmatprep.subr.mxu0 0.0
  %99 = vmatpush1.msra.mxu0 0.0
  %100 = vmatprep.subr.mxu0 0.0
  %101 = vmatpush1.msra.mxu0 0.0
  %102 = vmatprep.subr.mxu0 0.0
  %103 = vmatpush1.msra.mxu0 0.0
  %104 = vmatprep.subr.mxu0 0.0
  %105 = vmatpush1.msra.mxu0 0.0
  %106 = vmatprep.subr.mxu0 0.0
  %107 = vmatpush1.msra.mxu0 0.0
  %108 = vmatprep.subr.mxu0 0.0
  %109 = vmatpush1.msra.mxu0 0.0
  %110 = vmatprep.subr.mxu0 0.0
  %111 = vmatpush1.msra.mxu0 0.0
  %112 = vmatprep.subr.mxu0 0.0
  %113 = vmatpush1.msra.mxu0 0.0
  %114 = vmatprep.subr.mxu0 0.0
  %115 = vmatpush1.msra.mxu0 0.0
  %116 = vmatprep.subr.mxu0 0.0
  %117 = vmatpush1.msra.mxu0 0.0
  %118 = vmatprep.subr.mxu0 0.0
  %119 = vmatpush1.msra.mxu0 0.0
  %120 = vmatprep.subr.mxu0 0.0
  %121 = vmatpush1.msra.mxu0 0.0
  %122 = vmatprep.subr.mxu0 0.0
  %123 = vmatpush1.msra.mxu0 0.0
  %124 = vmatprep.subr.mxu0 0.0
  %125 = vmatpush1.msra.mxu0 0.0
  %126 = vmatprep.subr.mxu0 0.0
  %127 = vmatpush1.msra.mxu0 0.0
  %128 = vmatprep.subr.mxu0 0.0
  %129 = vmatpush1.msra.mxu0 0.0
  %130 = vmatprep.mubr.f32.mxu0 0.0
  %131 = vmatmul.mubr.f32.gmra.mrb[0].mxu0 %v55
  %v132 = vpop.f32.mrb[0].mxu0
  %v133 = vadd.f32 %v51, %v132
  %v134 = vpop.f32.mrb[0].mxu0
  %135 = vmatprep.mubr.f32.mxu0 0.0
  %136 = vmatmul.mubr.f32.gmra.mrb[0].mxu0 %v58
  %v137 = vpop.f32.mrb[0].mxu0
  %v138 = vadd.f32 %v51, %v137
  %v139 = vpop.f32.mrb[0].mxu0
  %140 = vmatprep.mubr.f32.mxu0 0.0
  %141 = vmatmul.mubr.f32.gmra.mrb[0].mxu0 %v61
  %v142 = vpop.f32.mrb[0].mxu0
  %v143 = vadd.f32 %v51, %v142
  %v144 = vpop.f32.mrb[0].mxu0
  %145 = vmatprep.mubr.f32.mxu0 0.0
  %146 = vmatmul.mubr.f32.gmra.mrb[0].mxu0 %v64
  %v147 = vpop.f32.mrb[0].mxu0
  %v148 = vadd.f32 %v51, %v147
  %v149 = vpop.f32.mrb[0].mxu0
  %150 = vdwg.mxu0
  %v151 = vld [vmem:[%s2] sm:$0xff]
  %v152 = vld [vmem:[%s2 + $0x8] sm:$0xff]
  %v153 = vld [vmem:[%s2 + $0x10] sm:$0xff]
  %v154 = vld [vmem:[%s2 + $0x18] sm:$0xff]
  %v155 = vld [vmem:[%s4] sm:$0x1]
  %v157 = vsel %vm53, 0.0, 0
  %159 = vmatprep.subr.mxu0 0.0
  %160 = vmatpush1.msra.mxu0 %v151
  %161 = vmatprep.subr.mxu0 0.0
  %162 = vmatpush1.msra.mxu0 %v152
  %163 = vmatprep.subr.mxu0 0.0
  %164 = vmatpush1.msra.mxu0 %v153
  %165 = vmatprep.subr.mxu0 0.0
  %166 = vmatpush1.msra.mxu0 %v154
  %167 = vmatprep.subr.mxu0 0.0
  %168 = vmatpush1.msra.mxu0 0.0
  %169 = vmatprep.subr.mxu0 0.0
  %170 = vmatpush1.msra.mxu0 0.0
  %171 = vmatprep.subr.mxu0 0.0
  %172 = vmatpush1.msra.mxu0 0.0
  %173 = vmatprep.subr.mxu0 0.0
  %174 = vmatpush1.msra.mxu0 0.0
  %175 = vmatprep.subr.mxu0 0.0
  %176 = vmatpush1.msra.mxu0 0.0
  %177 = vmatprep.subr.mxu0 0.0
  %178 = vmatpush1.msra.mxu0 0.0
  %179 = vmatprep.subr.mxu0 0.0
  %180 = vmatpush1.msra.mxu0 0.0
  %181 = vmatprep.subr.mxu0 0.0
  %182 = vmatpush1.msra.mxu0 0.0
  %183 = vmatprep.subr.mxu0 0.0
  %184 = vmatpush1.msra.mxu0 0.0
  %185 = vmatprep.subr.mxu0 0.0
  %186 = vmatpush1.msra.mxu0 0.0
  %187 = vmatprep.subr.mxu0 0.0
  %188 = vmatpush1.msra.mxu0 0.0
  %189 = vmatprep.subr.mxu0 0.0
  %190 = vmatpush1.msra.mxu0 0.0
  %191 = vmatprep.subr.mxu0 0.0
  %192 = vmatpush1.msra.mxu0 0.0
  %193 = vmatprep.subr.mxu0 0.0
  %194 = vmatpush1.msra.mxu0 0.0
  %195 = vmatprep.subr.mxu0 0.0
  %196 = vmatpush1.msra.mxu0 0.0
  %197 = vmatprep.subr.mxu0 0.0
  %198 = vmatpush1.msra.mxu0 0.0
  %199 = vmatprep.subr.mxu0 0.0
  %200 = vmatpush1.msra.mxu0 0.0
  %201 = vmatprep.subr.mxu0 0.0
  %202 = vmatpush1.msra.mxu0 0.0
  %203 = vmatprep.subr.mxu0 0.0
  %204 = vmatpush1.msra.mxu0 0.0
  %205 = vmatprep.subr.mxu0 0.0
  %206 = vmatpush1.msra.mxu0 0.0
  %207 = vmatprep.subr.mxu0 0.0
  %208 = vmatpush1.msra.mxu0 0.0
  %209 = vmatprep.subr.mxu0 0.0
  %210 = vmatpush1.msra.mxu0 0.0
  %211 = vmatprep.subr.mxu0 0.0
  %212 = vmatpush1.msra.mxu0 0.0
  %213 = vmatprep.subr.mxu0 0.0
  %214 = vmatpush1.msra.mxu0 0.0
  %215 = vmatprep.subr.mxu0 0.0
  %216 = vmatpush1.msra.mxu0 0.0
  %217 = vmatprep.subr.mxu0 0.0
  %218 = vmatpush1.msra.mxu0 0.0
  %219 = vmatprep.subr.mxu0 0.0
  %220 = vmatpush1.msra.mxu0 0.0
  %221 = vmatprep.subr.mxu0 0.0
  %222 = vmatpush1.msra.mxu0 0.0
  %223 = vmatprep.mubr.f32.mxu0 0.0
  %224 = vmatmul.mubr.f32.gmra.mrb[0].mxu0 %v157
  %v225 = vpop.f32.mrb[0].mxu0
  %v226 = vadd.f32 0.0, %v225
  %v227 = vpop.f32.mrb[0].mxu0
  %228 = vdwg.mxu0
  %v229 = vadd.f32 %v133, %v226
  %v230 = vxor.u32 %v229, 2147483648
  %v231 = vmul.f32 %v230, 1.442695
  %v232 = vpow.pop %v231
  %v233 = vadd.f32 %v232, 1.0
  %v234 = vrcp.pop %v233
  %v235 = vmul.f32 1.0, %v234
  %v237 = vlaneseq
  %v238 = vshrl.u32 %v237, 7
  %v239 = vsub.s32 0, %v238
  %v240 = vrot.slane %v155, %v239
  %241 = vrot.lane.b32.xlu0 %v240, 64
  %v242 = vpop.permute.xlu0 %241
  %v244 = vadd.f32 %v226, %v242
  %246 = vrot.lane.b32.xlu0 %v244, 64
  %v247 = vpop.permute.xlu0 %246
  %v249 = vmul.f32 %v235, %v247
  %251 = vrot.lane.b32.xlu0 %v249, 64
  %v252 = vpop.permute.xlu0 %251
  %v254 = vadd.f32 %v133, %v252
  %v255 = vtanh.pop %v254
  %v256 = vsub.f32 1.0, %v235
  %258 = vrot.lane.b32.xlu0 %v255, 96
  %v259 = vpop.permute.xlu0 %258
  %v261 = vmul.f32 %v256, %v259
  %v262 = vmul.f32 %v235, 0.0
  %v263 = vadd.f32 %v261, %v262
  %265 = vrot.lane.b32.xlu0 %v263, 96
  %v266 = vpop.permute.xlu0 %265
  %v267 = vsel %vm53, %v266, 0
  %269 = vmatprep.subr.mxu0 0.0
  %270 = vmatpush1.msra.mxu0 %v151
  %271 = vmatprep.subr.mxu0 0.0
  %272 = vmatpush1.msra.mxu0 %v152
  %273 = vmatprep.subr.mxu0 0.0
  %274 = vmatpush1.msra.mxu0 %v153
  %275 = vmatprep.subr.mxu0 0.0
  %276 = vmatpush1.msra.mxu0 %v154
  %277 = vmatprep.subr.mxu0 0.0
  %278 = vmatpush1.msra.mxu0 0.0
  %279 = vmatprep.subr.mxu0 0.0
  %280 = vmatpush1.msra.mxu0 0.0
  %281 = vmatprep.subr.mxu0 0.0
  %282 = vmatpush1.msra.mxu0 0.0
  %283 = vmatprep.subr.mxu0 0.0
  %284 = vmatpush1.msra.mxu0 0.0
  %285 = vmatprep.subr.mxu0 0.0
  %286 = vmatpush1.msra.mxu0 0.0
  %287 = vmatprep.subr.mxu0 0.0
  %288 = vmatpush1.msra.mxu0 0.0
  %289 = vmatprep.subr.mxu0 0.0
  %290 = vmatpush1.msra.mxu0 0.0
  %291 = vmatprep.subr.mxu0 0.0
  %292 = vmatpush1.msra.mxu0 0.0
  %293 = vmatprep.subr.mxu0 0.0
  %294 = vmatpush1.msra.mxu0 0.0
  %295 = vmatprep.subr.mxu0 0.0
  %296 = vmatpush1.msra.mxu0 0.0
  %297 = vmatprep.subr.mxu0 0.0
  %298 = vmatpush1.msra.mxu0 0.0
  %299 = vmatprep.subr.mxu0 0.0
  %300 = vmatpush1.msra.mxu0 0.0
  %301 = vmatprep.subr.mxu0 0.0
  %302 = vmatpush1.msra.mxu0 0.0
  %303 = vmatprep.subr.mxu0 0.0
  %304 = vmatpush1.msra.mxu0 0.0
  %305 = vmatprep.subr.mxu0 0.0
  %306 = vmatpush1.msra.mxu0 0.0
  %307 = vmatprep.subr.mxu0 0.0
  %308 = vmatpush1.msra.mxu0 0.0
  %309 = vmatprep.subr.mxu0 0.0
  %310 = vmatpush1.msra.mxu0 0.0
  %311 = vmatprep.subr.mxu0 0.0
  %312 = vmatpush1.msra.mxu0 0.0
  %313 = vmatprep.subr.mxu0 0.0
  %314 = vmatpush1.msra.mxu0 0.0
  %315 = vmatprep.subr.mxu0 0.0
  %316 = vmatpush1.msra.mxu0 0.0
  %317 = vmatprep.subr.mxu0 0.0
  %318 = vmatpush1.msra.mxu0 0.0
  %319 = vmatprep.subr.mxu0 0.0
  %320 = vmatpush1.msra.mxu0 0.0
  %321 = vmatprep.subr.mxu0 0.0
  %322 = vmatpush1.msra.mxu0 0.0
  %323 = vmatprep.subr.mxu0 0.0
  %324 = vmatpush1.msra.mxu0 0.0
  %325 = vmatprep.subr.mxu0 0.0
  %326 = vmatpush1.msra.mxu0 0.0
  %327 = vmatprep.subr.mxu0 0.0
  %328 = vmatpush1.msra.mxu0 0.0
  %329 = vmatprep.subr.mxu0 0.0
  %330 = vmatpush1.msra.mxu0 0.0
  %331 = vmatprep.subr.mxu0 0.0
  %332 = vmatpush1.msra.mxu0 0.0
  %333 = vmatprep.mubr.f32.mxu0 0.0
  %334 = vmatmul.mubr.f32.gmra.mrb[0].mxu0 %v267
  %v335 = vpop.f32.mrb[0].mxu0
  %v336 = vadd.f32 0.0, %v335
  %v337 = vpop.f32.mrb[0].mxu0
  %338 = vdwg.mxu0
  %v340 = vrot.slane %v336, 4
  %v342 = vadd.f32 %v133, %v340
  %v343 = vxor.u32 %v342, 2147483648
  %v344 = vmul.f32 %v343, 1.442695
  %v345 = vpow.pop %v344
  %v346 = vadd.f32 %v345, 1.0
  %v347 = vrcp.pop %v346
  %v348 = vmul.f32 1.0, %v347
  %v349 = vadd.f32 %v336, %v242
  %v351 = vrot.slane %v349, 4
  %352 = vrot.lane.b32.xlu0 %v351, 64
  %v353 = vpop.permute.xlu0 %352
  %v355 = vmul.f32 %v348, %v353
  %357 = vrot.lane.b32.xlu0 %v355, 64
  %v358 = vpop.permute.xlu0 %357
  %v360 = vadd.f32 %v133, %v358
  %v361 = vtanh.pop %v360
  %v362 = vsub.f32 1.0, %v348
  %364 = vrot.lane.b32.xlu0 %v361, 96
  %v365 = vpop.permute.xlu0 %364
  %v367 = vmul.f32 %v362, %v365
  %v368 = vrot.slane %v263, 4
  %v370 = vmul.f32 %v348, %v368
  %v371 = vadd.f32 %v367, %v370
  %v373 = vrot.slane %v371, 4
  %374 = vrot.lane.b32.xlu0 %v373, 96
  %v375 = vpop.permute.xlu0 %374
  %v376 = vsel %vm53, %v375, 0
  %378 = vmatprep.subr.mxu0 0.0
  %379 = vmatpush1.msra.mxu0 %v151
  %380 = vmatprep.subr.mxu0 0.0
  %381 = vmatpush1.msra.mxu0 %v152
  %382 = vmatprep.subr.mxu0 0.0
  %383 = vmatpush1.msra.mxu0 %v153
  %384 = vmatprep.subr.mxu0 0.0
  %385 = vmatpush1.msra.mxu0 %v154
  %386 = vmatprep.subr.mxu0 0.0
  %387 = vmatpush1.msra.mxu0 0.0
  %388 = vmatprep.subr.mxu0 0.0
  %389 = vmatpush1.msra.mxu0 0.0
  %390 = vmatprep.subr.mxu0 0.0
  %391 = vmatpush1.msra.mxu0 0.0
  %392 = vmatprep.subr.mxu0 0.0
  %393 = vmatpush1.msra.mxu0 0.0
  %394 = vmatprep.subr.mxu0 0.0
  %395 = vmatpush1.msra.mxu0 0.0
  %396 = vmatprep.subr.mxu0 0.0
  %397 = vmatpush1.msra.mxu0 0.0
  %398 = vmatprep.subr.mxu0 0.0
  %399 = vmatpush1.msra.mxu0 0.0
  %400 = vmatprep.subr.mxu0 0.0
  %401 = vmatpush1.msra.mxu0 0.0
  %402 = vmatprep.subr.mxu0 0.0
  %403 = vmatpush1.msra.mxu0 0.0
  %404 = vmatprep.subr.mxu0 0.0
  %405 = vmatpush1.msra.mxu0 0.0
  %406 = vmatprep.subr.mxu0 0.0
  %407 = vmatpush1.msra.mxu0 0.0
  %408 = vmatprep.subr.mxu0 0.0
  %409 = vmatpush1.msra.mxu0 0.0
  %410 = vmatprep.subr.mxu0 0.0
  %411 = vmatpush1.msra.mxu0 0.0
  %412 = vmatprep.subr.mxu0 0.0
  %413 = vmatpush1.msra.mxu0 0.0
  %414 = vmatprep.subr.mxu0 0.0
  %415 = vmatpush1.msra.mxu0 0.0
  %416 = vmatprep.subr.mxu0 0.0
  %417 = vmatpush1.msra.mxu0 0.0
  %418 = vmatprep.subr.mxu0 0.0
  %419 = vmatpush1.msra.mxu0 0.0
  %420 = vmatprep.subr.mxu0 0.0
  %421 = vmatpush1.msra.mxu0 0.0
  %422 = vmatprep.subr.mxu0 0.0
  %423 = vmatpush1.msra.mxu0 0.0
  %424 = vmatprep.subr.mxu0 0.0
  %425 = vmatpush1.msra.mxu0 0.0
  %426 = vmatprep.subr.mxu0 0.0
  %427 = vmatpush1.msra.mxu0 0.0
  %428 = vmatprep.subr.mxu0 0.0
  %429 = vmatpush1.msra.mxu0 0.0
  %430 = vmatprep.subr.mxu0 0.0
  %431 = vmatpush1.msra.mxu0 0.0
  %432 = vmatprep.subr.mxu0 0.0
  %433 = vmatpush1.msra.mxu0 0.0
  %434 = vmatprep.subr.mxu0 0.0
  %435 = vmatpush1.msra.mxu0 0.0
  %436 = vmatprep.subr.mxu0 0.0
  %437 = vmatpush1.msra.mxu0 0.0
  %438 = vmatprep.subr.mxu0 0.0
  %439 = vmatpush1.msra.mxu0 0.0
  %440 = vmatprep.subr.mxu0 0.0
  %441 = vmatpush1.msra.mxu0 0.0
  %442 = vmatprep.mubr.f32.mxu0 0.0
  %443 = vmatmul.mubr.f32.gmra.mrb[0].mxu0 %v376
  %v444 = vpop.f32.mrb[0].mxu0
  %v445 = vadd.f32 0.0, %v444
  %v446 = vpop.f32.mrb[0].mxu0
  %447 = vdwg.mxu0
  %v448 = vadd.f32 %v138, %v445
  %v449 = vxor.u32 %v448, 2147483648
  %v450 = vmul.f32 %v449, 1.442695
  %v451 = vpow.pop %v450
  %v452 = vadd.f32 %v451, 1.0
  %v453 = vrcp.pop %v452
  %v454 = vmul.f32 1.0, %v453
  %v455 = vadd.f32 %v445, %v242
  %457 = vrot.lane.b32.xlu0 %v455, 64
  %v458 = vpop.permute.xlu0 %457
  %v460 = vmul.f32 %v454, %v458
  %462 = vrot.lane.b32.xlu0 %v460, 64
  %v463 = vpop.permute.xlu0 %462
  %v465 = vadd.f32 %v138, %v463
  %v466 = vtanh.pop %v465
  %v467 = vsub.f32 1.0, %v454
  %469 = vrot.lane.b32.xlu0 %v466, 96
  %v470 = vpop.permute.xlu0 %469
  %v472 = vmul.f32 %v467, %v470
  %v474 = vmul.f32 %v454, %v373
  %v475 = vadd.f32 %v472, %v474
  %477 = vrot.lane.b32.xlu0 %v475, 96
  %v478 = vpop.permute.xlu0 %477
  %v479 = vsel %vm53, %v478, 0
  %481 = vmatprep.subr.mxu0 0.0
  %482 = vmatpush1.msra.mxu0 %v151
  %483 = vmatprep.subr.mxu0 0.0
  %484 = vmatpush1.msra.mxu0 %v152
  %485 = vmatprep.subr.mxu0 0.0
  %486 = vmatpush1.msra.mxu0 %v153
  %487 = vmatprep.subr.mxu0 0.0
  %488 = vmatpush1.msra.mxu0 %v154
  %489 = vmatprep.subr.mxu0 0.0
  %490 = vmatpush1.msra.mxu0 0.0
  %491 = vmatprep.subr.mxu0 0.0
  %492 = vmatpush1.msra.mxu0 0.0
  %493 = vmatprep.subr.mxu0 0.0
  %494 = vmatpush1.msra.mxu0 0.0
  %495 = vmatprep.subr.mxu0 0.0
  %496 = vmatpush1.msra.mxu0 0.0
  %497 = vmatprep.subr.mxu0 0.0
  %498 = vmatpush1.msra.mxu0 0.0
  %499 = vmatprep.subr.mxu0 0.0
  %500 = vmatpush1.msra.mxu0 0.0
  %501 = vmatprep.subr.mxu0 0.0
  %502 = vmatpush1.msra.mxu0 0.0
  %503 = vmatprep.subr.mxu0 0.0
  %504 = vmatpush1.msra.mxu0 0.0
  %505 = vmatprep.subr.mxu0 0.0
  %506 = vmatpush1.msra.mxu0 0.0
  %507 = vmatprep.subr.mxu0 0.0
  %508 = vmatpush1.msra.mxu0 0.0
  %509 = vmatprep.subr.mxu0 0.0
  %510 = vmatpush1.msra.mxu0 0.0
  %511 = vmatprep.subr.mxu0 0.0
  %512 = vmatpush1.msra.mxu0 0.0
  %513 = vmatprep.subr.mxu0 0.0
  %514 = vmatpush1.msra.mxu0 0.0
  %515 = vmatprep.subr.mxu0 0.0
  %516 = vmatpush1.msra.mxu0 0.0
  %517 = vmatprep.subr.mxu0 0.0
  %518 = vmatpush1.msra.mxu0 0.0
  %519 = vmatprep.subr.mxu0 0.0
  %520 = vmatpush1.msra.mxu0 0.0
  %521 = vmatprep.subr.mxu0 0.0
  %522 = vmatpush1.msra.mxu0 0.0
  %523 = vmatprep.subr.mxu0 0.0
  %524 = vmatpush1.msra.mxu0 0.0
  %525 = vmatprep.subr.mxu0 0.0
  %526 = vmatpush1.msra.mxu0 0.0
  %527 = vmatprep.subr.mxu0 0.0
  %528 = vmatpush1.msra.mxu0 0.0
  %529 = vmatprep.subr.mxu0 0.0
  %530 = vmatpush1.msra.mxu0 0.0
  %531 = vmatprep.subr.mxu0 0.0
  %532 = vmatpush1.msra.mxu0 0.0
  %533 = vmatprep.subr.mxu0 0.0
  %534 = vmatpush1.msra.mxu0 0.0
  %535 = vmatprep.subr.mxu0 0.0
  %536 = vmatpush1.msra.mxu0 0.0
  %537 = vmatprep.subr.mxu0 0.0
  %538 = vmatpush1.msra.mxu0 0.0
  %539 = vmatprep.subr.mxu0 0.0
  %540 = vmatpush1.msra.mxu0 0.0
  %541 = vmatprep.subr.mxu0 0.0
  %542 = vmatpush1.msra.mxu0 0.0
  %543 = vmatprep.subr.mxu0 0.0
  %544 = vmatpush1.msra.mxu0 0.0
  %545 = vmatprep.mubr.f32.mxu0 0.0
  %546 = vmatmul.mubr.f32.gmra.mrb[0].mxu0 %v479
  %v547 = vpop.f32.mrb[0].mxu0
  %v548 = vadd.f32 0.0, %v547
  %v549 = vpop.f32.mrb[0].mxu0
  %550 = vdwg.mxu0
  %v552 = vrot.slane %v548, 4
  %v554 = vadd.f32 %v138, %v552
  %v555 = vxor.u32 %v554, 2147483648
  %v556 = vmul.f32 %v555, 1.442695
  %v557 = vpow.pop %v556
  %v558 = vadd.f32 %v557, 1.0
  %v559 = vrcp.pop %v558
  %v560 = vmul.f32 1.0, %v559
  %v561 = vadd.f32 %v548, %v242
  %v563 = vrot.slane %v561, 4
  %564 = vrot.lane.b32.xlu0 %v563, 64
  %v565 = vpop.permute.xlu0 %564
  %v567 = vmul.f32 %v560, %v565
  %569 = vrot.lane.b32.xlu0 %v567, 64
  %v570 = vpop.permute.xlu0 %569
  %v572 = vadd.f32 %v138, %v570
  %v573 = vtanh.pop %v572
  %v574 = vsub.f32 1.0, %v560
  %576 = vrot.lane.b32.xlu0 %v573, 96
  %v577 = vpop.permute.xlu0 %576
  %v579 = vmul.f32 %v574, %v577
  %v580 = vrot.slane %v475, 4
  %v582 = vmul.f32 %v560, %v580
  %v583 = vadd.f32 %v579, %v582
  %v585 = vrot.slane %v583, 4
  %586 = vrot.lane.b32.xlu0 %v585, 96
  %v587 = vpop.permute.xlu0 %586
  %v588 = vsel %vm53, %v587, 0
  %590 = vmatprep.subr.mxu0 0.0
  %591 = vmatpush1.msra.mxu0 %v151
  %592 = vmatprep.subr.mxu0 0.0
  %593 = vmatpush1.msra.mxu0 %v152
  %594 = vmatprep.subr.mxu0 0.0
  %595 = vmatpush1.msra.mxu0 %v153
  %596 = vmatprep.subr.mxu0 0.0
  %597 = vmatpush1.msra.mxu0 %v154
  %598 = vmatprep.subr.mxu0 0.0
  %599 = vmatpush1.msra.mxu0 0.0
  %600 = vmatprep.subr.mxu0 0.0
  %601 = vmatpush1.msra.mxu0 0.0
  %602 = vmatprep.subr.mxu0 0.0
  %603 = vmatpush1.msra.mxu0 0.0
  %604 = vmatprep.subr.mxu0 0.0
  %605 = vmatpush1.msra.mxu0 0.0
  %606 = vmatprep.subr.mxu0 0.0
  %607 = vmatpush1.msra.mxu0 0.0
  %608 = vmatprep.subr.mxu0 0.0
  %609 = vmatpush1.msra.mxu0 0.0
  %610 = vmatprep.subr.mxu0 0.0
  %611 = vmatpush1.msra.mxu0 0.0
  %612 = vmatprep.subr.mxu0 0.0
  %613 = vmatpush1.msra.mxu0 0.0
  %614 = vmatprep.subr.mxu0 0.0
  %615 = vmatpush1.msra.mxu0 0.0
  %616 = vmatprep.subr.mxu0 0.0
  %617 = vmatpush1.msra.mxu0 0.0
  %618 = vmatprep.subr.mxu0 0.0
  %619 = vmatpush1.msra.mxu0 0.0
  %620 = vmatprep.subr.mxu0 0.0
  %621 = vmatpush1.msra.mxu0 0.0
  %622 = vmatprep.subr.mxu0 0.0
  %623 = vmatpush1.msra.mxu0 0.0
  %624 = vmatprep.subr.mxu0 0.0
  %625 = vmatpush1.msra.mxu0 0.0
  %626 = vmatprep.subr.mxu0 0.0
  %627 = vmatpush1.msra.mxu0 0.0
  %628 = vmatprep.subr.mxu0 0.0
  %629 = vmatpush1.msra.mxu0 0.0
  %630 = vmatprep.subr.mxu0 0.0
  %631 = vmatpush1.msra.mxu0 0.0
  %632 = vmatprep.subr.mxu0 0.0
  %633 = vmatpush1.msra.mxu0 0.0
  %634 = vmatprep.subr.mxu0 0.0
  %635 = vmatpush1.msra.mxu0 0.0
  %636 = vmatprep.subr.mxu0 0.0
  %637 = vmatpush1.msra.mxu0 0.0
  %638 = vmatprep.subr.mxu0 0.0
  %639 = vmatpush1.msra.mxu0 0.0
  %640 = vmatprep.subr.mxu0 0.0
  %641 = vmatpush1.msra.mxu0 0.0
  %642 = vmatprep.subr.mxu0 0.0
  %643 = vmatpush1.msra.mxu0 0.0
  %644 = vmatprep.subr.mxu0 0.0
  %645 = vmatpush1.msra.mxu0 0.0
  %646 = vmatprep.subr.mxu0 0.0
  %647 = vmatpush1.msra.mxu0 0.0
  %648 = vmatprep.subr.mxu0 0.0
  %649 = vmatpush1.msra.mxu0 0.0
  %650 = vmatprep.subr.mxu0 0.0
  %651 = vmatpush1.msra.mxu0 0.0
  %652 = vmatprep.subr.mxu0 0.0
  %653 = vmatpush1.msra.mxu0 0.0
  %654 = vmatprep.mubr.f32.mxu0 0.0
  %655 = vmatmul.mubr.f32.gmra.mrb[0].mxu0 %v588
  %v656 = vpop.f32.mrb[0].mxu0
  %v657 = vadd.f32 0.0, %v656
  %v658 = vpop.f32.mrb[0].mxu0
  %659 = vdwg.mxu0
  %v660 = vadd.f32 %v143, %v657
  %v661 = vxor.u32 %v660, 2147483648
  %v662 = vmul.f32 %v661, 1.442695
  %v663 = vpow.pop %v662
  %v664 = vadd.f32 %v663, 1.0
  %v665 = vrcp.pop %v664
  %v666 = vmul.f32 1.0, %v665
  %v667 = vadd.f32 %v657, %v242
  %669 = vrot.lane.b32.xlu0 %v667, 64
  %v670 = vpop.permute.xlu0 %669
  %v672 = vmul.f32 %v666, %v670
  %674 = vrot.lane.b32.xlu0 %v672, 64
  %v675 = vpop.permute.xlu0 %674
  %v677 = vadd.f32 %v143, %v675
  %v678 = vtanh.pop %v677
  %v679 = vsub.f32 1.0, %v666
  %681 = vrot.lane.b32.xlu0 %v678, 96
  %v682 = vpop.permute.xlu0 %681
  %v684 = vmul.f32 %v679, %v682
  %v686 = vmul.f32 %v666, %v585
  %v687 = vadd.f32 %v684, %v686
  %689 = vrot.lane.b32.xlu0 %v687, 96
  %v690 = vpop.permute.xlu0 %689
  %v691 = vsel %vm53, %v690, 0
  %693 = vmatprep.subr.mxu0 0.0
  %694 = vmatpush1.msra.mxu0 %v151
  %695 = vmatprep.subr.mxu0 0.0
  %696 = vmatpush1.msra.mxu0 %v152
  %697 = vmatprep.subr.mxu0 0.0
  %698 = vmatpush1.msra.mxu0 %v153
  %699 = vmatprep.subr.mxu0 0.0
  %700 = vmatpush1.msra.mxu0 %v154
  %701 = vmatprep.subr.mxu0 0.0
  %702 = vmatpush1.msra.mxu0 0.0
  %703 = vmatprep.subr.mxu0 0.0
  %704 = vmatpush1.msra.mxu0 0.0
  %705 = vmatprep.subr.mxu0 0.0
  %706 = vmatpush1.msra.mxu0 0.0
  %707 = vmatprep.subr.mxu0 0.0
  %708 = vmatpush1.msra.mxu0 0.0
  %709 = vmatprep.subr.mxu0 0.0
  %710 = vmatpush1.msra.mxu0 0.0
  %711 = vmatprep.subr.mxu0 0.0
  %712 = vmatpush1.msra.mxu0 0.0
  %713 = vmatprep.subr.mxu0 0.0
  %714 = vmatpush1.msra.mxu0 0.0
  %715 = vmatprep.subr.mxu0 0.0
  %716 = vmatpush1.msra.mxu0 0.0
  %717 = vmatprep.subr.mxu0 0.0
  %718 = vmatpush1.msra.mxu0 0.0
  %719 = vmatprep.subr.mxu0 0.0
  %720 = vmatpush1.msra.mxu0 0.0
  %721 = vmatprep.subr.mxu0 0.0
  %722 = vmatpush1.msra.mxu0 0.0
  %723 = vmatprep.subr.mxu0 0.0
  %724 = vmatpush1.msra.mxu0 0.0
  %725 = vmatprep.subr.mxu0 0.0
  %726 = vmatpush1.msra.mxu0 0.0
  %727 = vmatprep.subr.mxu0 0.0
  %728 = vmatpush1.msra.mxu0 0.0
  %729 = vmatprep.subr.mxu0 0.0
  %730 = vmatpush1.msra.mxu0 0.0
  %731 = vmatprep.subr.mxu0 0.0
  %732 = vmatpush1.msra.mxu0 0.0
  %733 = vmatprep.subr.mxu0 0.0
  %734 = vmatpush1.msra.mxu0 0.0
  %735 = vmatprep.subr.mxu0 0.0
  %736 = vmatpush1.msra.mxu0 0.0
  %737 = vmatprep.subr.mxu0 0.0
  %738 = vmatpush1.msra.mxu0 0.0
  %739 = vmatprep.subr.mxu0 0.0
  %740 = vmatpush1.msra.mxu0 0.0
  %741 = vmatprep.subr.mxu0 0.0
  %742 = vmatpush1.msra.mxu0 0.0
  %743 = vmatprep.subr.mxu0 0.0
  %744 = vmatpush1.msra.mxu0 0.0
  %745 = vmatprep.subr.mxu0 0.0
  %746 = vmatpush1.msra.mxu0 0.0
  %747 = vmatprep.subr.mxu0 0.0
  %748 = vmatpush1.msra.mxu0 0.0
  %749 = vmatprep.subr.mxu0 0.0
  %750 = vmatpush1.msra.mxu0 0.0
  %751 = vmatprep.subr.mxu0 0.0
  %752 = vmatpush1.msra.mxu0 0.0
  %753 = vmatprep.subr.mxu0 0.0
  %754 = vmatpush1.msra.mxu0 0.0
  %755 = vmatprep.subr.mxu0 0.0
  %756 = vmatpush1.msra.mxu0 0.0
  %757 = vmatprep.mubr.f32.mxu0 0.0
  %758 = vmatmul.mubr.f32.gmra.mrb[0].mxu0 %v691
  %v759 = vpop.f32.mrb[0].mxu0
  %v760 = vadd.f32 0.0, %v759
  %v761 = vpop.f32.mrb[0].mxu0
  %762 = vdwg.mxu0
  %v764 = vrot.slane %v760, 4
  %v766 = vadd.f32 %v143, %v764
  %v767 = vxor.u32 %v766, 2147483648
  %v768 = vmul.f32 %v767, 1.442695
  %v769 = vpow.pop %v768
  %v770 = vadd.f32 %v769, 1.0
  %v771 = vrcp.pop %v770
  %v772 = vmul.f32 1.0, %v771
  %v773 = vadd.f32 %v760, %v242
  %v775 = vrot.slane %v773, 4
  %776 = vrot.lane.b32.xlu0 %v775, 64
  %v777 = vpop.permute.xlu0 %776
  %v779 = vmul.f32 %v772, %v777
  %781 = vrot.lane.b32.xlu0 %v779, 64
  %v782 = vpop.permute.xlu0 %781
  %v784 = vadd.f32 %v143, %v782
  %v785 = vtanh.pop %v784
  %v786 = vsub.f32 1.0, %v772
  %788 = vrot.lane.b32.xlu0 %v785, 96
  %v789 = vpop.permute.xlu0 %788
  %v791 = vmul.f32 %v786, %v789
  %v792 = vrot.slane %v687, 4
  %v794 = vmul.f32 %v772, %v792
  %v795 = vadd.f32 %v791, %v794
  %v797 = vrot.slane %v795, 4
  %798 = vrot.lane.b32.xlu0 %v797, 96
  %v799 = vpop.permute.xlu0 %798
  %v800 = vsel %vm53, %v799, 0
  %802 = vmatprep.subr.mxu0 0.0
  %803 = vmatpush1.msra.mxu0 %v151
  %804 = vmatprep.subr.mxu0 0.0
  %805 = vmatpush1.msra.mxu0 %v152
  %806 = vmatprep.subr.mxu0 0.0
  %807 = vmatpush1.msra.mxu0 %v153
  %808 = vmatprep.subr.mxu0 0.0
  %809 = vmatpush1.msra.mxu0 %v154
  %810 = vmatprep.subr.mxu0 0.0
  %811 = vmatpush1.msra.mxu0 0.0
  %812 = vmatprep.subr.mxu0 0.0
  %813 = vmatpush1.msra.mxu0 0.0
  %814 = vmatprep.subr.mxu0 0.0
  %815 = vmatpush1.msra.mxu0 0.0
  %816 = vmatprep.subr.mxu0 0.0
  %817 = vmatpush1.msra.mxu0 0.0
  %818 = vmatprep.subr.mxu0 0.0
  %819 = vmatpush1.msra.mxu0 0.0
  %820 = vmatprep.subr.mxu0 0.0
  %821 = vmatpush1.msra.mxu0 0.0
  %822 = vmatprep.subr.mxu0 0.0
  %823 = vmatpush1.msra.mxu0 0.0
  %824 = vmatprep.subr.mxu0 0.0
  %825 = vmatpush1.msra.mxu0 0.0
  %826 = vmatprep.subr.mxu0 0.0
  %827 = vmatpush1.msra.mxu0 0.0
  %828 = vmatprep.subr.mxu0 0.0
  %829 = vmatpush1.msra.mxu0 0.0
  %830 = vmatprep.subr.mxu0 0.0
  %831 = vmatpush1.msra.mxu0 0.0
  %832 = vmatprep.subr.mxu0 0.0
  %833 = vmatpush1.msra.mxu0 0.0
  %834 = vmatprep.subr.mxu0 0.0
  %835 = vmatpush1.msra.mxu0 0.0
  %836 = vmatprep.subr.mxu0 0.0
  %837 = vmatpush1.msra.mxu0 0.0
  %838 = vmatprep.subr.mxu0 0.0
  %839 = vmatpush1.msra.mxu0 0.0
  %840 = vmatprep.subr.mxu0 0.0
  %841 = vmatpush1.msra.mxu0 0.0
  %842 = vmatprep.subr.mxu0 0.0
  %843 = vmatpush1.msra.mxu0 0.0
  %844 = vmatprep.subr.mxu0 0.0
  %845 = vmatpush1.msra.mxu0 0.0
  %846 = vmatprep.subr.mxu0 0.0
  %847 = vmatpush1.msra.mxu0 0.0
  %848 = vmatprep.subr.mxu0 0.0
  %849 = vmatpush1.msra.mxu0 0.0
  %850 = vmatprep.subr.mxu0 0.0
  %851 = vmatpush1.msra.mxu0 0.0
  %852 = vmatprep.subr.mxu0 0.0
  %853 = vmatpush1.msra.mxu0 0.0
  %854 = vmatprep.subr.mxu0 0.0
  %855 = vmatpush1.msra.mxu0 0.0
  %856 = vmatprep.subr.mxu0 0.0
  %857 = vmatpush1.msra.mxu0 0.0
  %858 = vmatprep.subr.mxu0 0.0
  %859 = vmatpush1.msra.mxu0 0.0
  %860 = vmatprep.subr.mxu0 0.0
  %861 = vmatpush1.msra.mxu0 0.0
  %862 = vmatprep.subr.mxu0 0.0
  %863 = vmatpush1.msra.mxu0 0.0
  %864 = vmatprep.subr.mxu0 0.0
  %865 = vmatpush1.msra.mxu0 0.0
  %866 = vmatprep.mubr.f32.mxu0 0.0
  %867 = vmatmul.mubr.f32.gmra.mrb[0].mxu0 %v800
  %v868 = vpop.f32.mrb[0].mxu0
  %v869 = vadd.f32 0.0, %v868
  %v870 = vpop.f32.mrb[0].mxu0
  %871 = vdwg.mxu0
  %v872 = vadd.f32 %v148, %v869
  %v873 = vxor.u32 %v872, 2147483648
  %v874 = vmul.f32 %v873, 1.442695
  %v875 = vpow.pop %v874
  %v876 = vadd.f32 %v875, 1.0
  %v877 = vrcp.pop %v876
  %v878 = vmul.f32 1.0, %v877
  %v879 = vadd.f32 %v869, %v242
  %881 = vrot.lane.b32.xlu0 %v879, 64
  %v882 = vpop.permute.xlu0 %881
  %v884 = vmul.f32 %v878, %v882
  %886 = vrot.lane.b32.xlu0 %v884, 64
  %v887 = vpop.permute.xlu0 %886
  %v889 = vadd.f32 %v148, %v887
  %v890 = vtanh.pop %v889
  %v891 = vsub.f32 1.0, %v878
  %893 = vrot.lane.b32.xlu0 %v890, 96
  %v894 = vpop.permute.xlu0 %893
  %v896 = vmul.f32 %v891, %v894
  %v898 = vmul.f32 %v878, %v797
  %v899 = vadd.f32 %v896, %v898
  %901 = vrot.lane.b32.xlu0 %v899, 96
  %v902 = vpop.permute.xlu0 %901
  %v903 = vsel %vm53, %v902, 0
  %905 = vmatprep.subr.mxu0 0.0
  %906 = vmatpush1.msra.mxu0 %v151
  %907 = vmatprep.subr.mxu0 0.0
  %908 = vmatpush1.msra.mxu0 %v152
  %909 = vmatprep.subr.mxu0 0.0
  %910 = vmatpush1.msra.mxu0 %v153
  %911 = vmatprep.subr.mxu0 0.0
  %912 = vmatpush1.msra.mxu0 %v154
  %913 = vmatprep.subr.mxu0 0.0
  %914 = vmatpush1.msra.mxu0 0.0
  %915 = vmatprep.subr.mxu0 0.0
  %916 = vmatpush1.msra.mxu0 0.0
  %917 = vmatprep.subr.mxu0 0.0
  %918 = vmatpush1.msra.mxu0 0.0
  %919 = vmatprep.subr.mxu0 0.0
  %920 = vmatpush1.msra.mxu0 0.0
  %921 = vmatprep.subr.mxu0 0.0
  %922 = vmatpush1.msra.mxu0 0.0
  %923 = vmatprep.subr.mxu0 0.0
  %924 = vmatpush1.msra.mxu0 0.0
  %925 = vmatprep.subr.mxu0 0.0
  %926 = vmatpush1.msra.mxu0 0.0
  %927 = vmatprep.subr.mxu0 0.0
  %928 = vmatpush1.msra.mxu0 0.0
  %929 = vmatprep.subr.mxu0 0.0
  %930 = vmatpush1.msra.mxu0 0.0
  %931 = vmatprep.subr.mxu0 0.0
  %932 = vmatpush1.msra.mxu0 0.0
  %933 = vmatprep.subr.mxu0 0.0
  %934 = vmatpush1.msra.mxu0 0.0
  %935 = vmatprep.subr.mxu0 0.0
  %936 = vmatpush1.msra.mxu0 0.0
  %937 = vmatprep.subr.mxu0 0.0
  %938 = vmatpush1.msra.mxu0 0.0
  %939 = vmatprep.subr.mxu0 0.0
  %940 = vmatpush1.msra.mxu0 0.0
  %941 = vmatprep.subr.mxu0 0.0
  %942 = vmatpush1.msra.mxu0 0.0
  %943 = vmatprep.subr.mxu0 0.0
  %944 = vmatpush1.msra.mxu0 0.0
  %945 = vmatprep.subr.mxu0 0.0
  %946 = vmatpush1.msra.mxu0 0.0
  %947 = vmatprep.subr.mxu0 0.0
  %948 = vmatpush1.msra.mxu0 0.0
  %949 = vmatprep.subr.mxu0 0.0
  %950 = vmatpush1.msra.mxu0 0.0
  %951 = vmatprep.subr.mxu0 0.0
  %952 = vmatpush1.msra.mxu0 0.0
  %953 = vmatprep.subr.mxu0 0.0
  %954 = vmatpush1.msra.mxu0 0.0
  %955 = vmatprep.subr.mxu0 0.0
  %956 = vmatpush1.msra.mxu0 0.0
  %957 = vmatprep.subr.mxu0 0.0
  %958 = vmatpush1.msra.mxu0 0.0
  %959 = vmatprep.subr.mxu0 0.0
  %960 = vmatpush1.msra.mxu0 0.0
  %961 = vmatprep.subr.mxu0 0.0
  %962 = vmatpush1.msra.mxu0 0.0
  %963 = vmatprep.subr.mxu0 0.0
  %964 = vmatpush1.msra.mxu0 0.0
  %965 = vmatprep.subr.mxu0 0.0
  %966 = vmatpush1.msra.mxu0 0.0
  %967 = vmatprep.subr.mxu0 0.0
  %968 = vmatpush1.msra.mxu0 0.0
  %969 = vmatprep.mubr.f32.mxu0 0.0
  %970 = vmatmul.mubr.f32.gmra.mrb[0].mxu0 %v903
  %v971 = vpop.f32.mrb[0].mxu0
  %v972 = vadd.f32 0.0, %v971
  %v973 = vpop.f32.mrb[0].mxu0
  %974 = vdwg.mxu0
  %v976 = vrot.slane %v972, 4
  %v978 = vadd.f32 %v148, %v976
  %v979 = vxor.u32 %v978, 2147483648
  %v980 = vmul.f32 %v979, 1.442695
  %v981 = vpow.pop %v980
  %v982 = vadd.f32 %v981, 1.0
  %v983 = vrcp.pop %v982
  %v984 = vmul.f32 1.0, %v983
  %v985 = vadd.f32 %v972, %v242
  %v987 = vrot.slane %v985, 4
  %988 = vrot.lane.b32.xlu0 %v987, 64
  %v989 = vpop.permute.xlu0 %988
  %v991 = vmul.f32 %v984, %v989
  %993 = vrot.lane.b32.xlu0 %v991, 64
  %v994 = vpop.permute.xlu0 %993
  %v996 = vadd.f32 %v148, %v994
  %v997 = vtanh.pop %v996
  %v998 = vsub.f32 1.0, %v984
  %1000 = vrot.lane.b32.xlu0 %v997, 96
  %v1001 = vpop.permute.xlu0 %1000
  %v1003 = vmul.f32 %v998, %v1001
  %v1004 = vrot.slane %v899, 4
  %v1006 = vmul.f32 %v984, %v1004
  %v1007 = vadd.f32 %v1003, %v1006
  %vm1008 = vcmask 1043456
  %v1009 = vsel %vm1008, %v263, %v371
  %v1010 = vsel %vm1008, %v475, %v583
  %v1011 = vsel %vm1008, %v687, %v795
  %v1012 = vsel %vm1008, %v899, %v1007
  %v1013 = vld [vmem:[%s5] sm:$0xff]
  %v1014 = vld [vmem:[%s5 + $0x8] sm:$0xff]
  %v1015 = vld [vmem:[%s5 + $0x10] sm:$0xff]
  %v1016 = vld [vmem:[%s5 + $0x18] sm:$0xff]
  %v1017 = vld [vmem:[%s7] sm:$0x1]
  %v1019 = vlaneseq
  %v1020 = vshrl.u32 %v1019, 7
  %v1021 = vsub.s32 0, %v1020
  %v1022 = vrot.slane %v1017, %v1021
  %1028 = vrot.lane.b32.xlu0 %v1009, 96
  %v1029 = vpop.permute.xlu0 %1028
  %1030 = vrot.lane.b32.xlu0 %v1010, 96
  %v1031 = vpop.permute.xlu0 %1030
  %1032 = vrot.lane.b32.xlu0 %v1011, 96
  %v1033 = vpop.permute.xlu0 %1032
  %1034 = vrot.lane.b32.xlu0 %v1012, 96
  %v1035 = vpop.permute.xlu0 %1034
  %v1036 = vsel %vm53, %v1029, 0
  %v1038 = vsel %vm53, %v1031, 0
  %v1040 = vsel %vm53, %v1033, 0
  %v1042 = vsel %vm53, %v1035, 0
  %1044 = vmatprep.subr.mxu0 0.0
  %1045 = vmatpush1.msra.mxu0 %v1013
  %1046 = vmatprep.subr.mxu0 0.0
  %1047 = vmatpush1.msra.mxu0 %v1014
  %1048 = vmatprep.subr.mxu0 0.0
  %1049 = vmatpush1.msra.mxu0 %v1015
  %1050 = vmatprep.subr.mxu0 0.0
  %1051 = vmatpush1.msra.mxu0 %v1016
  %1052 = vmatprep.subr.mxu0 0.0
  %1053 = vmatpush1.msra.mxu0 0.0
  %1054 = vmatprep.subr.mxu0 0.0
  %1055 = vmatpush1.msra.mxu0 0.0
  %1056 = vmatprep.subr.mxu0 0.0
  %1057 = vmatpush1.msra.mxu0 0.0
  %1058 = vmatprep.subr.mxu0 0.0
  %1059 = vmatpush1.msra.mxu0 0.0
  %1060 = vmatprep.subr.mxu0 0.0
  %1061 = vmatpush1.msra.mxu0 0.0
  %1062 = vmatprep.subr.mxu0 0.0
  %1063 = vmatpush1.msra.mxu0 0.0
  %1064 = vmatprep.subr.mxu0 0.0
  %1065 = vmatpush1.msra.mxu0 0.0
  %1066 = vmatprep.subr.mxu0 0.0
  %1067 = vmatpush1.msra.mxu0 0.0
  %1068 = vmatprep.subr.mxu0 0.0
  %1069 = vmatpush1.msra.mxu0 0.0
  %1070 = vmatprep.subr.mxu0 0.0
  %1071 = vmatpush1.msra.mxu0 0.0
  %1072 = vmatprep.subr.mxu0 0.0
  %1073 = vmatpush1.msra.mxu0 0.0
  %1074 = vmatprep.subr.mxu0 0.0
  %1075 = vmatpush1.msra.mxu0 0.0
  %1076 = vmatprep.subr.mxu0 0.0
  %1077 = vmatpush1.msra.mxu0 0.0
  %1078 = vmatprep.subr.mxu0 0.0
  %1079 = vmatpush1.msra.mxu0 0.0
  %1080 = vmatprep.subr.mxu0 0.0
  %1081 = vmatpush1.msra.mxu0 0.0
  %1082 = vmatprep.subr.mxu0 0.0
  %1083 = vmatpush1.msra.mxu0 0.0
  %1084 = vmatprep.subr.mxu0 0.0
  %1085 = vmatpush1.msra.mxu0 0.0
  %1086 = vmatprep.subr.mxu0 0.0
  %1087 = vmatpush1.msra.mxu0 0.0
  %1088 = vmatprep.subr.mxu0 0.0
  %1089 = vmatpush1.msra.mxu0 0.0
  %1090 = vmatprep.subr.mxu0 0.0
  %1091 = vmatpush1.msra.mxu0 0.0
  %1092 = vmatprep.subr.mxu0 0.0
  %1093 = vmatpush1.msra.mxu0 0.0
  %1094 = vmatprep.subr.mxu0 0.0
  %1095 = vmatpush1.msra.mxu0 0.0
  %1096 = vmatprep.subr.mxu0 0.0
  %1097 = vmatpush1.msra.mxu0 0.0
  %1098 = vmatprep.subr.mxu0 0.0
  %1099 = vmatpush1.msra.mxu0 0.0
  %1100 = vmatprep.subr.mxu0 0.0
  %1101 = vmatpush1.msra.mxu0 0.0
  %1102 = vmatprep.subr.mxu0 0.0
  %1103 = vmatpush1.msra.mxu0 0.0
  %1104 = vmatprep.subr.mxu0 0.0
  %1105 = vmatpush1.msra.mxu0 0.0
  %1106 = vmatprep.subr.mxu0 0.0
  %1107 = vmatpush1.msra.mxu0 0.0
  %1108 = vmatprep.mubr.f32.mxu0 0.0
  %1109 = vmatmul.mubr.f32.gmra.mrb[0].mxu0 %v1036
  %v1110 = vpop.f32.mrb[0].mxu0
  %v1111 = vadd.f32 %v1022, %v1110
  %v1112 = vpop.f32.mrb[0].mxu0
  %1113 = vmatprep.mubr.f32.mxu0 0.0
  %1114 = vmatmul.mubr.f32.gmra.mrb[0].mxu0 %v1038
  %v1115 = vpop.f32.mrb[0].mxu0
  %v1116 = vadd.f32 %v1022, %v1115
  %v1117 = vpop.f32.mrb[0].mxu0
  %1118 = vmatprep.mubr.f32.mxu0 0.0
  %1119 = vmatmul.mubr.f32.gmra.mrb[0].mxu0 %v1040
  %v1120 = vpop.f32.mrb[0].mxu0
  %v1121 = vadd.f32 %v1022, %v1120
  %v1122 = vpop.f32.mrb[0].mxu0
  %1123 = vmatprep.mubr.f32.mxu0 0.0
  %1124 = vmatmul.mubr.f32.gmra.mrb[0].mxu0 %v1042
  %v1125 = vpop.f32.mrb[0].mxu0
  %v1126 = vadd.f32 %v1022, %v1125
  %v1127 = vpop.f32.mrb[0].mxu0
  %1128 = vdwg.mxu0
  %v1129 = vld [vmem:[%s6] sm:$0xff]
  %v1130 = vld [vmem:[%s6 + $0x8] sm:$0xff]
  %v1131 = vld [vmem:[%s6 + $0x10] sm:$0xff]
  %v1132 = vld [vmem:[%s6 + $0x18] sm:$0xff]
  %v1133 = vld [vmem:[%s8] sm:$0x1]
  %1134 = vmatprep.subr.mxu0 0.0
  %1135 = vmatpush1.msra.mxu0 %v1129
  %1136 = vmatprep.subr.mxu0 0.0
  %1137 = vmatpush1.msra.mxu0 %v1130
  %1138 = vmatprep.subr.mxu0 0.0
  %1139 = vmatpush1.msra.mxu0 %v1131
  %1140 = vmatprep.subr.mxu0 0.0
  %1141 = vmatpush1.msra.mxu0 %v1132
  %1142 = vmatprep.subr.mxu0 0.0
  %1143 = vmatpush1.msra.mxu0 0.0
  %1144 = vmatprep.subr.mxu0 0.0
  %1145 = vmatpush1.msra.mxu0 0.0
  %1146 = vmatprep.subr.mxu0 0.0
  %1147 = vmatpush1.msra.mxu0 0.0
  %1148 = vmatprep.subr.mxu0 0.0
  %1149 = vmatpush1.msra.mxu0 0.0
  %1150 = vmatprep.subr.mxu0 0.0
  %1151 = vmatpush1.msra.mxu0 0.0
  %1152 = vmatprep.subr.mxu0 0.0
  %1153 = vmatpush1.msra.mxu0 0.0
  %1154 = vmatprep.subr.mxu0 0.0
  %1155 = vmatpush1.msra.mxu0 0.0
  %1156 = vmatprep.subr.mxu0 0.0
  %1157 = vmatpush1.msra.mxu0 0.0
  %1158 = vmatprep.subr.mxu0 0.0
  %1159 = vmatpush1.msra.mxu0 0.0
  %1160 = vmatprep.subr.mxu0 0.0
  %1161 = vmatpush1.msra.mxu0 0.0
  %1162 = vmatprep.subr.mxu0 0.0
  %1163 = vmatpush1.msra.mxu0 0.0
  %1164 = vmatprep.subr.mxu0 0.0
  %1165 = vmatpush1.msra.mxu0 0.0
  %1166 = vmatprep.subr.mxu0 0.0
  %1167 = vmatpush1.msra.mxu0 0.0
  %1168 = vmatprep.subr.mxu0 0.0
  %1169 = vmatpush1.msra.mxu0 0.0
  %1170 = vmatprep.subr.mxu0 0.0
  %1171 = vmatpush1.msra.mxu0 0.0
  %1172 = vmatprep.subr.mxu0 0.0
  %1173 = vmatpush1.msra.mxu0 0.0
  %1174 = vmatprep.subr.mxu0 0.0
  %1175 = vmatpush1.msra.mxu0 0.0
  %1176 = vmatprep.subr.mxu0 0.0
  %1177 = vmatpush1.msra.mxu0 0.0
  %1178 = vmatprep.subr.mxu0 0.0
  %1179 = vmatpush1.msra.mxu0 0.0
  %1180 = vmatprep.subr.mxu0 0.0
  %1181 = vmatpush1.msra.mxu0 0.0
  %1182 = vmatprep.subr.mxu0 0.0
  %1183 = vmatpush1.msra.mxu0 0.0
  %1184 = vmatprep.subr.mxu0 0.0
  %1185 = vmatpush1.msra.mxu0 0.0
  %1186 = vmatprep.subr.mxu0 0.0
  %1187 = vmatpush1.msra.mxu0 0.0
  %1188 = vmatprep.subr.mxu0 0.0
  %1189 = vmatpush1.msra.mxu0 0.0
  %1190 = vmatprep.subr.mxu0 0.0
  %1191 = vmatpush1.msra.mxu0 0.0
  %1192 = vmatprep.subr.mxu0 0.0
  %1193 = vmatpush1.msra.mxu0 0.0
  %1194 = vmatprep.subr.mxu0 0.0
  %1195 = vmatpush1.msra.mxu0 0.0
  %1196 = vmatprep.subr.mxu0 0.0
  %1197 = vmatpush1.msra.mxu0 0.0
  %1198 = vmatprep.mubr.f32.mxu0 0.0
  %1199 = vmatmul.mubr.f32.gmra.mrb[0].mxu0 %v157
  %v1200 = vpop.f32.mrb[0].mxu0
  %v1201 = vadd.f32 0.0, %v1200
  %v1202 = vpop.f32.mrb[0].mxu0
  %1203 = vdwg.mxu0
  %v1204 = vadd.f32 %v1111, %v1201
  %v1205 = vxor.u32 %v1204, 2147483648
  %v1206 = vmul.f32 %v1205, 1.442695
  %v1207 = vpow.pop %v1206
  %v1208 = vadd.f32 %v1207, 1.0
  %v1209 = vrcp.pop %v1208
  %v1210 = vmul.f32 1.0, %v1209
  %v1212 = vlaneseq
  %v1213 = vshrl.u32 %v1212, 7
  %v1214 = vsub.s32 0, %v1213
  %v1215 = vrot.slane %v1133, %v1214
  %1216 = vrot.lane.b32.xlu0 %v1215, 64
  %v1217 = vpop.permute.xlu0 %1216
  %v1219 = vadd.f32 %v1201, %v1217
  %1221 = vrot.lane.b32.xlu0 %v1219, 64
  %v1222 = vpop.permute.xlu0 %1221
  %v1224 = vmul.f32 %v1210, %v1222
  %1226 = vrot.lane.b32.xlu0 %v1224, 64
  %v1227 = vpop.permute.xlu0 %1226
  %v1229 = vadd.f32 %v1111, %v1227
  %v1230 = vtanh.pop %v1229
  %v1231 = vsub.f32 1.0, %v1210
  %1233 = vrot.lane.b32.xlu0 %v1230, 96
  %v1234 = vpop.permute.xlu0 %1233
  %v1236 = vmul.f32 %v1231, %v1234
  %v1237 = vmul.f32 %v1210, 0.0
  %v1238 = vadd.f32 %v1236, %v1237
  %1240 = vrot.lane.b32.xlu0 %v1238, 96
  %v1241 = vpop.permute.xlu0 %1240
  %v1242 = vsel %vm53, %v1241, 0
  %1244 = vmatprep.subr.mxu0 0.0
  %1245 = vmatpush1.msra.mxu0 %v1129
  %1246 = vmatprep.subr.mxu0 0.0
  %1247 = vmatpush1.msra.mxu0 %v1130
  %1248 = vmatprep.subr.mxu0 0.0
  %1249 = vmatpush1.msra.mxu0 %v1131
  %1250 = vmatprep.subr.mxu0 0.0
  %1251 = vmatpush1.msra.mxu0 %v1132
  %1252 = vmatprep.subr.mxu0 0.0
  %1253 = vmatpush1.msra.mxu0 0.0
  %1254 = vmatprep.subr.mxu0 0.0
  %1255 = vmatpush1.msra.mxu0 0.0
  %1256 = vmatprep.subr.mxu0 0.0
  %1257 = vmatpush1.msra.mxu0 0.0
  %1258 = vmatprep.subr.mxu0 0.0
  %1259 = vmatpush1.msra.mxu0 0.0
  %1260 = vmatprep.subr.mxu0 0.0
  %1261 = vmatpush1.msra.mxu0 0.0
  %1262 = vmatprep.subr.mxu0 0.0
  %1263 = vmatpush1.msra.mxu0 0.0
  %1264 = vmatprep.subr.mxu0 0.0
  %1265 = vmatpush1.msra.mxu0 0.0
  %1266 = vmatprep.subr.mxu0 0.0
  %1267 = vmatpush1.msra.mxu0 0.0
  %1268 = vmatprep.subr.mxu0 0.0
  %1269 = vmatpush1.msra.mxu0 0.0
  %1270 = vmatprep.subr.mxu0 0.0
  %1271 = vmatpush1.msra.mxu0 0.0
  %1272 = vmatprep.subr.mxu0 0.0
  %1273 = vmatpush1.msra.mxu0 0.0
  %1274 = vmatprep.subr.mxu0 0.0
  %1275 = vmatpush1.msra.mxu0 0.0
  %1276 = vmatprep.subr.mxu0 0.0
  %1277 = vmatpush1.msra.mxu0 0.0
  %1278 = vmatprep.subr.mxu0 0.0
  %1279 = vmatpush1.msra.mxu0 0.0
  %1280 = vmatprep.subr.mxu0 0.0
  %1281 = vmatpush1.msra.mxu0 0.0
  %1282 = vmatprep.subr.mxu0 0.0
  %1283 = vmatpush1.msra.mxu0 0.0
  %1284 = vmatprep.subr.mxu0 0.0
  %1285 = vmatpush1.msra.mxu0 0.0
  %1286 = vmatprep.subr.mxu0 0.0
  %1287 = vmatpush1.msra.mxu0 0.0
  %1288 = vmatprep.subr.mxu0 0.0
  %1289 = vmatpush1.msra.mxu0 0.0
  %1290 = vmatprep.subr.mxu0 0.0
  %1291 = vmatpush1.msra.mxu0 0.0
  %1292 = vmatprep.subr.mxu0 0.0
  %1293 = vmatpush1.msra.mxu0 0.0
  %1294 = vmatprep.subr.mxu0 0.0
  %1295 = vmatpush1.msra.mxu0 0.0
  %1296 = vmatprep.subr.mxu0 0.0
  %1297 = vmatpush1.msra.mxu0 0.0
  %1298 = vmatprep.subr.mxu0 0.0
  %1299 = vmatpush1.msra.mxu0 0.0
  %1300 = vmatprep.subr.mxu0 0.0
  %1301 = vmatpush1.msra.mxu0 0.0
  %1302 = vmatprep.subr.mxu0 0.0
  %1303 = vmatpush1.msra.mxu0 0.0
  %1304 = vmatprep.subr.mxu0 0.0
  %1305 = vmatpush1.msra.mxu0 0.0
  %1306 = vmatprep.subr.mxu0 0.0
  %1307 = vmatpush1.msra.mxu0 0.0
  %1308 = vmatprep.mubr.f32.mxu0 0.0
  %1309 = vmatmul.mubr.f32.gmra.mrb[0].mxu0 %v1242
  %v1310 = vpop.f32.mrb[0].mxu0
  %v1311 = vadd.f32 0.0, %v1310
  %v1312 = vpop.f32.mrb[0].mxu0
  %1313 = vdwg.mxu0
  %v1315 = vrot.slane %v1311, 4
  %v1317 = vadd.f32 %v1111, %v1315
  %v1318 = vxor.u32 %v1317, 2147483648
  %v1319 = vmul.f32 %v1318, 1.442695
  %v1320 = vpow.pop %v1319
  %v1321 = vadd.f32 %v1320, 1.0
  %v1322 = vrcp.pop %v1321
  %v1323 = vmul.f32 1.0, %v1322
  %v1324 = vadd.f32 %v1311, %v1217
  %v1326 = vrot.slane %v1324, 4
  %1327 = vrot.lane.b32.xlu0 %v1326, 64
  %v1328 = vpop.permute.xlu0 %1327
  %v1330 = vmul.f32 %v1323, %v1328
  %1332 = vrot.lane.b32.xlu0 %v1330, 64
  %v1333 = vpop.permute.xlu0 %1332
  %v1335 = vadd.f32 %v1111, %v1333
  %v1336 = vtanh.pop %v1335
  %v1337 = vsub.f32 1.0, %v1323
  %1339 = vrot.lane.b32.xlu0 %v1336, 96
  %v1340 = vpop.permute.xlu0 %1339
  %v1342 = vmul.f32 %v1337, %v1340
  %v1343 = vrot.slane %v1238, 4
  %v1345 = vmul.f32 %v1323, %v1343
  %v1346 = vadd.f32 %v1342, %v1345
  %v1348 = vrot.slane %v1346, 4
  %1349 = vrot.lane.b32.xlu0 %v1348, 96
  %v1350 = vpop.permute.xlu0 %1349
  %v1351 = vsel %vm53, %v1350, 0
  %1353 = vmatprep.subr.mxu0 0.0
  %1354 = vmatpush1.msra.mxu0 %v1129
  %1355 = vmatprep.subr.mxu0 0.0
  %1356 = vmatpush1.msra.mxu0 %v1130
  %1357 = vmatprep.subr.mxu0 0.0
  %1358 = vmatpush1.msra.mxu0 %v1131
  %1359 = vmatprep.subr.mxu0 0.0
  %1360 = vmatpush1.msra.mxu0 %v1132
  %1361 = vmatprep.subr.mxu0 0.0
  %1362 = vmatpush1.msra.mxu0 0.0
  %1363 = vmatprep.subr.mxu0 0.0
  %1364 = vmatpush1.msra.mxu0 0.0
  %1365 = vmatprep.subr.mxu0 0.0
  %1366 = vmatpush1.msra.mxu0 0.0
  %1367 = vmatprep.subr.mxu0 0.0
  %1368 = vmatpush1.msra.mxu0 0.0
  %1369 = vmatprep.subr.mxu0 0.0
  %1370 = vmatpush1.msra.mxu0 0.0
  %1371 = vmatprep.subr.mxu0 0.0
  %1372 = vmatpush1.msra.mxu0 0.0
  %1373 = vmatprep.subr.mxu0 0.0
  %1374 = vmatpush1.msra.mxu0 0.0
  %1375 = vmatprep.subr.mxu0 0.0
  %1376 = vmatpush1.msra.mxu0 0.0
  %1377 = vmatprep.subr.mxu0 0.0
  %1378 = vmatpush1.msra.mxu0 0.0
  %1379 = vmatprep.subr.mxu0 0.0
  %1380 = vmatpush1.msra.mxu0 0.0
  %1381 = vmatprep.subr.mxu0 0.0
  %1382 = vmatpush1.msra.mxu0 0.0
  %1383 = vmatprep.subr.mxu0 0.0
  %1384 = vmatpush1.msra.mxu0 0.0
  %1385 = vmatprep.subr.mxu0 0.0
  %1386 = vmatpush1.msra.mxu0 0.0
  %1387 = vmatprep.subr.mxu0 0.0
  %1388 = vmatpush1.msra.mxu0 0.0
  %1389 = vmatprep.subr.mxu0 0.0
  %1390 = vmatpush1.msra.mxu0 0.0
  %1391 = vmatprep.subr.mxu0 0.0
  %1392 = vmatpush1.msra.mxu0 0.0
  %1393 = vmatprep.subr.mxu0 0.0
  %1394 = vmatpush1.msra.mxu0 0.0
  %1395 = vmatprep.subr.mxu0 0.0
  %1396 = vmatpush1.msra.mxu0 0.0
  %1397 = vmatprep.subr.mxu0 0.0
  %1398 = vmatpush1.msra.mxu0 0.0
  %1399 = vmatprep.subr.mxu0 0.0
  %1400 = vmatpush1.msra.mxu0 0.0
  %1401 = vmatprep.subr.mxu0 0.0
  %1402 = vmatpush1.msra.mxu0 0.0
  %1403 = vmatprep.subr.mxu0 0.0
  %1404 = vmatpush1.msra.mxu0 0.0
  %1405 = vmatprep.subr.mxu0 0.0
  %1406 = vmatpush1.msra.mxu0 0.0
  %1407 = vmatprep.subr.mxu0 0.0
  %1408 = vmatpush1.msra.mxu0 0.0
  %1409 = vmatprep.subr.mxu0 0.0
  %1410 = vmatpush1.msra.mxu0 0.0
  %1411 = vmatprep.subr.mxu0 0.0
  %1412 = vmatpush1.msra.mxu0 0.0
  %1413 = vmatprep.subr.mxu0 0.0
  %1414 = vmatpush1.msra.mxu0 0.0
  %1415 = vmatprep.subr.mxu0 0.0
  %1416 = vmatpush1.msra.mxu0 0.0
  %1417 = vmatprep.mubr.f32.mxu0 0.0
  %1418 = vmatmul.mubr.f32.gmra.mrb[0].mxu0 %v1351
  %v1419 = vpop.f32.mrb[0].mxu0
  %v1420 = vadd.f32 0.0, %v1419
  %v1421 = vpop.f32.mrb[0].mxu0
  %1422 = vdwg.mxu0
  %v1423 = vadd.f32 %v1116, %v1420
  %v1424 = vxor.u32 %v1423, 2147483648
  %v1425 = vmul.f32 %v1424, 1.442695
  %v1426 = vpow.pop %v1425
  %v1427 = vadd.f32 %v1426, 1.0
  %v1428 = vrcp.pop %v1427
  %v1429 = vmul.f32 1.0, %v1428
  %v1430 = vadd.f32 %v1420, %v1217
  %1432 = vrot.lane.b32.xlu0 %v1430, 64
  %v1433 = vpop.permute.xlu0 %1432
  %v1435 = vmul.f32 %v1429, %v1433
  %1437 = vrot.lane.b32.xlu0 %v1435, 64
  %v1438 = vpop.permute.xlu0 %1437
  %v1440 = vadd.f32 %v1116, %v1438
  %v1441 = vtanh.pop %v1440
  %v1442 = vsub.f32 1.0, %v1429
  %1444 = vrot.lane.b32.xlu0 %v1441, 96
  %v1445 = vpop.permute.xlu0 %1444
  %v1447 = vmul.f32 %v1442, %v1445
  %v1449 = vmul.f32 %v1429, %v1348
  %v1450 = vadd.f32 %v1447, %v1449
  %1452 = vrot.lane.b32.xlu0 %v1450, 96
  %v1453 = vpop.permute.xlu0 %1452
  %v1454 = vsel %vm53, %v1453, 0
  %1456 = vmatprep.subr.mxu0 0.0
  %1457 = vmatpush1.msra.mxu0 %v1129
  %1458 = vmatprep.subr.mxu0 0.0
  %1459 = vmatpush1.msra.mxu0 %v1130
  %1460 = vmatprep.subr.mxu0 0.0
  %1461 = vmatpush1.msra.mxu0 %v1131
  %1462 = vmatprep.subr.mxu0 0.0
  %1463 = vmatpush1.msra.mxu0 %v1132
  %1464 = vmatprep.subr.mxu0 0.0
  %1465 = vmatpush1.msra.mxu0 0.0
  %1466 = vmatprep.subr.mxu0 0.0
  %1467 = vmatpush1.msra.mxu0 0.0
  %1468 = vmatprep.subr.mxu0 0.0
  %1469 = vmatpush1.msra.mxu0 0.0
  %1470 = vmatprep.subr.mxu0 0.0
  %1471 = vmatpush1.msra.mxu0 0.0
  %1472 = vmatprep.subr.mxu0 0.0
  %1473 = vmatpush1.msra.mxu0 0.0
  %1474 = vmatprep.subr.mxu0 0.0
  %1475 = vmatpush1.msra.mxu0 0.0
  %1476 = vmatprep.subr.mxu0 0.0
  %1477 = vmatpush1.msra.mxu0 0.0
  %1478 = vmatprep.subr.mxu0 0.0
  %1479 = vmatpush1.msra.mxu0 0.0
  %1480 = vmatprep.subr.mxu0 0.0
  %1481 = vmatpush1.msra.mxu0 0.0
  %1482 = vmatprep.subr.mxu0 0.0
  %1483 = vmatpush1.msra.mxu0 0.0
  %1484 = vmatprep.subr.mxu0 0.0
  %1485 = vmatpush1.msra.mxu0 0.0
  %1486 = vmatprep.subr.mxu0 0.0
  %1487 = vmatpush1.msra.mxu0 0.0
  %1488 = vmatprep.subr.mxu0 0.0
  %1489 = vmatpush1.msra.mxu0 0.0
  %1490 = vmatprep.subr.mxu0 0.0
  %1491 = vmatpush1.msra.mxu0 0.0
  %1492 = vmatprep.subr.mxu0 0.0
  %1493 = vmatpush1.msra.mxu0 0.0
  %1494 = vmatprep.subr.mxu0 0.0
  %1495 = vmatpush1.msra.mxu0 0.0
  %1496 = vmatprep.subr.mxu0 0.0
  %1497 = vmatpush1.msra.mxu0 0.0
  %1498 = vmatprep.subr.mxu0 0.0
  %1499 = vmatpush1.msra.mxu0 0.0
  %1500 = vmatprep.subr.mxu0 0.0
  %1501 = vmatpush1.msra.mxu0 0.0
  %1502 = vmatprep.subr.mxu0 0.0
  %1503 = vmatpush1.msra.mxu0 0.0
  %1504 = vmatprep.subr.mxu0 0.0
  %1505 = vmatpush1.msra.mxu0 0.0
  %1506 = vmatprep.subr.mxu0 0.0
  %1507 = vmatpush1.msra.mxu0 0.0
  %1508 = vmatprep.subr.mxu0 0.0
  %1509 = vmatpush1.msra.mxu0 0.0
  %1510 = vmatprep.subr.mxu0 0.0
  %1511 = vmatpush1.msra.mxu0 0.0
  %1512 = vmatprep.subr.mxu0 0.0
  %1513 = vmatpush1.msra.mxu0 0.0
  %1514 = vmatprep.subr.mxu0 0.0
  %1515 = vmatpush1.msra.mxu0 0.0
  %1516 = vmatprep.subr.mxu0 0.0
  %1517 = vmatpush1.msra.mxu0 0.0
  %1518 = vmatprep.subr.mxu0 0.0
  %1519 = vmatpush1.msra.mxu0 0.0
  %1520 = vmatprep.mubr.f32.mxu0 0.0
  %1521 = vmatmul.mubr.f32.gmra.mrb[0].mxu0 %v1454
  %v1522 = vpop.f32.mrb[0].mxu0
  %v1523 = vadd.f32 0.0, %v1522
  %v1524 = vpop.f32.mrb[0].mxu0
  %1525 = vdwg.mxu0
  %v1527 = vrot.slane %v1523, 4
  %v1529 = vadd.f32 %v1116, %v1527
  %v1530 = vxor.u32 %v1529, 2147483648
  %v1531 = vmul.f32 %v1530, 1.442695
  %v1532 = vpow.pop %v1531
  %v1533 = vadd.f32 %v1532, 1.0
  %v1534 = vrcp.pop %v1533
  %v1535 = vmul.f32 1.0, %v1534
  %v1536 = vadd.f32 %v1523, %v1217
  %v1538 = vrot.slane %v1536, 4
  %1539 = vrot.lane.b32.xlu0 %v1538, 64
  %v1540 = vpop.permute.xlu0 %1539
  %v1542 = vmul.f32 %v1535, %v1540
  %1544 = vrot.lane.b32.xlu0 %v1542, 64
  %v1545 = vpop.permute.xlu0 %1544
  %v1547 = vadd.f32 %v1116, %v1545
  %v1548 = vtanh.pop %v1547
  %v1549 = vsub.f32 1.0, %v1535
  %1551 = vrot.lane.b32.xlu0 %v1548, 96
  %v1552 = vpop.permute.xlu0 %1551
  %v1554 = vmul.f32 %v1549, %v1552
  %v1555 = vrot.slane %v1450, 4
  %v1557 = vmul.f32 %v1535, %v1555
  %v1558 = vadd.f32 %v1554, %v1557
  %v1560 = vrot.slane %v1558, 4
  %1561 = vrot.lane.b32.xlu0 %v1560, 96
  %v1562 = vpop.permute.xlu0 %1561
  %v1563 = vsel %vm53, %v1562, 0
  %1565 = vmatprep.subr.mxu0 0.0
  %1566 = vmatpush1.msra.mxu0 %v1129
  %1567 = vmatprep.subr.mxu0 0.0
  %1568 = vmatpush1.msra.mxu0 %v1130
  %1569 = vmatprep.subr.mxu0 0.0
  %1570 = vmatpush1.msra.mxu0 %v1131
  %1571 = vmatprep.subr.mxu0 0.0
  %1572 = vmatpush1.msra.mxu0 %v1132
  %1573 = vmatprep.subr.mxu0 0.0
  %1574 = vmatpush1.msra.mxu0 0.0
  %1575 = vmatprep.subr.mxu0 0.0
  %1576 = vmatpush1.msra.mxu0 0.0
  %1577 = vmatprep.subr.mxu0 0.0
  %1578 = vmatpush1.msra.mxu0 0.0
  %1579 = vmatprep.subr.mxu0 0.0
  %1580 = vmatpush1.msra.mxu0 0.0
  %1581 = vmatprep.subr.mxu0 0.0
  %1582 = vmatpush1.msra.mxu0 0.0
  %1583 = vmatprep.subr.mxu0 0.0
  %1584 = vmatpush1.msra.mxu0 0.0
  %1585 = vmatprep.subr.mxu0 0.0
  %1586 = vmatpush1.msra.mxu0 0.0
  %1587 = vmatprep.subr.mxu0 0.0
  %1588 = vmatpush1.msra.mxu0 0.0
  %1589 = vmatprep.subr.mxu0 0.0
  %1590 = vmatpush1.msra.mxu0 0.0
  %1591 = vmatprep.subr.mxu0 0.0
  %1592 = vmatpush1.msra.mxu0 0.0
  %1593 = vmatprep.subr.mxu0 0.0
  %1594 = vmatpush1.msra.mxu0 0.0
  %1595 = vmatprep.subr.mxu0 0.0
  %1596 = vmatpush1.msra.mxu0 0.0
  %1597 = vmatprep.subr.mxu0 0.0
  %1598 = vmatpush1.msra.mxu0 0.0
  %1599 = vmatprep.subr.mxu0 0.0
  %1600 = vmatpush1.msra.mxu0 0.0
  %1601 = vmatprep.subr.mxu0 0.0
  %1602 = vmatpush1.msra.mxu0 0.0
  %1603 = vmatprep.subr.mxu0 0.0
  %1604 = vmatpush1.msra.mxu0 0.0
  %1605 = vmatprep.subr.mxu0 0.0
  %1606 = vmatpush1.msra.mxu0 0.0
  %1607 = vmatprep.subr.mxu0 0.0
  %1608 = vmatpush1.msra.mxu0 0.0
  %1609 = vmatprep.subr.mxu0 0.0
  %1610 = vmatpush1.msra.mxu0 0.0
  %1611 = vmatprep.subr.mxu0 0.0
  %1612 = vmatpush1.msra.mxu0 0.0
  %1613 = vmatprep.subr.mxu0 0.0
  %1614 = vmatpush1.msra.mxu0 0.0
  %1615 = vmatprep.subr.mxu0 0.0
  %1616 = vmatpush1.msra.mxu0 0.0
  %1617 = vmatprep.subr.mxu0 0.0
  %1618 = vmatpush1.msra.mxu0 0.0
  %1619 = vmatprep.subr.mxu0 0.0
  %1620 = vmatpush1.msra.mxu0 0.0
  %1621 = vmatprep.subr.mxu0 0.0
  %1622 = vmatpush1.msra.mxu0 0.0
  %1623 = vmatprep.subr.mxu0 0.0
  %1624 = vmatpush1.msra.mxu0 0.0
  %1625 = vmatprep.subr.mxu0 0.0
  %1626 = vmatpush1.msra.mxu0 0.0
  %1627 = vmatprep.subr.mxu0 0.0
  %1628 = vmatpush1.msra.mxu0 0.0
  %1629 = vmatprep.mubr.f32.mxu0 0.0
  %1630 = vmatmul.mubr.f32.gmra.mrb[0].mxu0 %v1563
  %v1631 = vpop.f32.mrb[0].mxu0
  %v1632 = vadd.f32 0.0, %v1631
  %v1633 = vpop.f32.mrb[0].mxu0
  %1634 = vdwg.mxu0
  %v1635 = vadd.f32 %v1121, %v1632
  %v1636 = vxor.u32 %v1635, 2147483648
  %v1637 = vmul.f32 %v1636, 1.442695
  %v1638 = vpow.pop %v1637
  %v1639 = vadd.f32 %v1638, 1.0
  %v1640 = vrcp.pop %v1639
  %v1641 = vmul.f32 1.0, %v1640
  %v1642 = vadd.f32 %v1632, %v1217
  %1644 = vrot.lane.b32.xlu0 %v1642, 64
  %v1645 = vpop.permute.xlu0 %1644
  %v1647 = vmul.f32 %v1641, %v1645
  %1649 = vrot.lane.b32.xlu0 %v1647, 64
  %v1650 = vpop.permute.xlu0 %1649
  %v1652 = vadd.f32 %v1121, %v1650
  %v1653 = vtanh.pop %v1652
  %v1654 = vsub.f32 1.0, %v1641
  %1656 = vrot.lane.b32.xlu0 %v1653, 96
  %v1657 = vpop.permute.xlu0 %1656
  %v1659 = vmul.f32 %v1654, %v1657
  %v1661 = vmul.f32 %v1641, %v1560
  %v1662 = vadd.f32 %v1659, %v1661
  %1664 = vrot.lane.b32.xlu0 %v1662, 96
  %v1665 = vpop.permute.xlu0 %1664
  %v1666 = vsel %vm53, %v1665, 0
  %1668 = vmatprep.subr.mxu0 0.0
  %1669 = vmatpush1.msra.mxu0 %v1129
  %1670 = vmatprep.subr.mxu0 0.0
  %1671 = vmatpush1.msra.mxu0 %v1130
  %1672 = vmatprep.subr.mxu0 0.0
  %1673 = vmatpush1.msra.mxu0 %v1131
  %1674 = vmatprep.subr.mxu0 0.0
  %1675 = vmatpush1.msra.mxu0 %v1132
  %1676 = vmatprep.subr.mxu0 0.0
  %1677 = vmatpush1.msra.mxu0 0.0
  %1678 = vmatprep.subr.mxu0 0.0
  %1679 = vmatpush1.msra.mxu0 0.0
  %1680 = vmatprep.subr.mxu0 0.0
  %1681 = vmatpush1.msra.mxu0 0.0
  %1682 = vmatprep.subr.mxu0 0.0
  %1683 = vmatpush1.msra.mxu0 0.0
  %1684 = vmatprep.subr.mxu0 0.0
  %1685 = vmatpush1.msra.mxu0 0.0
  %1686 = vmatprep.subr.mxu0 0.0
  %1687 = vmatpush1.msra.mxu0 0.0
  %1688 = vmatprep.subr.mxu0 0.0
  %1689 = vmatpush1.msra.mxu0 0.0
  %1690 = vmatprep.subr.mxu0 0.0
  %1691 = vmatpush1.msra.mxu0 0.0
  %1692 = vmatprep.subr.mxu0 0.0
  %1693 = vmatpush1.msra.mxu0 0.0
  %1694 = vmatprep.subr.mxu0 0.0
  %1695 = vmatpush1.msra.mxu0 0.0
  %1696 = vmatprep.subr.mxu0 0.0
  %1697 = vmatpush1.msra.mxu0 0.0
  %1698 = vmatprep.subr.mxu0 0.0
  %1699 = vmatpush1.msra.mxu0 0.0
  %1700 = vmatprep.subr.mxu0 0.0
  %1701 = vmatpush1.msra.mxu0 0.0
  %1702 = vmatprep.subr.mxu0 0.0
  %1703 = vmatpush1.msra.mxu0 0.0
  %1704 = vmatprep.subr.mxu0 0.0
  %1705 = vmatpush1.msra.mxu0 0.0
  %1706 = vmatprep.subr.mxu0 0.0
  %1707 = vmatpush1.msra.mxu0 0.0
  %1708 = vmatprep.subr.mxu0 0.0
  %1709 = vmatpush1.msra.mxu0 0.0
  %1710 = vmatprep.subr.mxu0 0.0
  %1711 = vmatpush1.msra.mxu0 0.0
  %1712 = vmatprep.subr.mxu0 0.0
  %1713 = vmatpush1.msra.mxu0 0.0
  %1714 = vmatprep.subr.mxu0 0.0
  %1715 = vmatpush1.msra.mxu0 0.0
  %1716 = vmatprep.subr.mxu0 0.0
  %1717 = vmatpush1.msra.mxu0 0.0
  %1718 = vmatprep.subr.mxu0 0.0
  %1719 = vmatpush1.msra.mxu0 0.0
  %1720 = vmatprep.subr.mxu0 0.0
  %1721 = vmatpush1.msra.mxu0 0.0
  %1722 = vmatprep.subr.mxu0 0.0
  %1723 = vmatpush1.msra.mxu0 0.0
  %1724 = vmatprep.subr.mxu0 0.0
  %1725 = vmatpush1.msra.mxu0 0.0
  %1726 = vmatprep.subr.mxu0 0.0
  %1727 = vmatpush1.msra.mxu0 0.0
  %1728 = vmatprep.subr.mxu0 0.0
  %1729 = vmatpush1.msra.mxu0 0.0
  %1730 = vmatprep.subr.mxu0 0.0
  %1731 = vmatpush1.msra.mxu0 0.0
  %1732 = vmatprep.mubr.f32.mxu0 0.0
  %1733 = vmatmul.mubr.f32.gmra.mrb[0].mxu0 %v1666
  %v1734 = vpop.f32.mrb[0].mxu0
  %v1735 = vadd.f32 0.0, %v1734
  %v1736 = vpop.f32.mrb[0].mxu0
  %1737 = vdwg.mxu0
  %v1739 = vrot.slane %v1735, 4
  %v1741 = vadd.f32 %v1121, %v1739
  %v1742 = vxor.u32 %v1741, 2147483648
  %v1743 = vmul.f32 %v1742, 1.442695
  %v1744 = vpow.pop %v1743
  %v1745 = vadd.f32 %v1744, 1.0
  %v1746 = vrcp.pop %v1745
  %v1747 = vmul.f32 1.0, %v1746
  %v1748 = vadd.f32 %v1735, %v1217
  %v1750 = vrot.slane %v1748, 4
  %1751 = vrot.lane.b32.xlu0 %v1750, 64
  %v1752 = vpop.permute.xlu0 %1751
  %v1754 = vmul.f32 %v1747, %v1752
  %1756 = vrot.lane.b32.xlu0 %v1754, 64
  %v1757 = vpop.permute.xlu0 %1756
  %v1759 = vadd.f32 %v1121, %v1757
  %v1760 = vtanh.pop %v1759
  %v1761 = vsub.f32 1.0, %v1747
  %1763 = vrot.lane.b32.xlu0 %v1760, 96
  %v1764 = vpop.permute.xlu0 %1763
  %v1766 = vmul.f32 %v1761, %v1764
  %v1767 = vrot.slane %v1662, 4
  %v1769 = vmul.f32 %v1747, %v1767
  %v1770 = vadd.f32 %v1766, %v1769
  %v1772 = vrot.slane %v1770, 4
  %1773 = vrot.lane.b32.xlu0 %v1772, 96
  %v1774 = vpop.permute.xlu0 %1773
  %v1775 = vsel %vm53, %v1774, 0
  %1777 = vmatprep.subr.mxu0 0.0
  %1778 = vmatpush1.msra.mxu0 %v1129
  %1779 = vmatprep.subr.mxu0 0.0
  %1780 = vmatpush1.msra.mxu0 %v1130
  %1781 = vmatprep.subr.mxu0 0.0
  %1782 = vmatpush1.msra.mxu0 %v1131
  %1783 = vmatprep.subr.mxu0 0.0
  %1784 = vmatpush1.msra.mxu0 %v1132
  %1785 = vmatprep.subr.mxu0 0.0
  %1786 = vmatpush1.msra.mxu0 0.0
  %1787 = vmatprep.subr.mxu0 0.0
  %1788 = vmatpush1.msra.mxu0 0.0
  %1789 = vmatprep.subr.mxu0 0.0
  %1790 = vmatpush1.msra.mxu0 0.0
  %1791 = vmatprep.subr.mxu0 0.0
  %1792 = vmatpush1.msra.mxu0 0.0
  %1793 = vmatprep.subr.mxu0 0.0
  %1794 = vmatpush1.msra.mxu0 0.0
  %1795 = vmatprep.subr.mxu0 0.0
  %1796 = vmatpush1.msra.mxu0 0.0
  %1797 = vmatprep.subr.mxu0 0.0
  %1798 = vmatpush1.msra.mxu0 0.0
  %1799 = vmatprep.subr.mxu0 0.0
  %1800 = vmatpush1.msra.mxu0 0.0
  %1801 = vmatprep.subr.mxu0 0.0
  %1802 = vmatpush1.msra.mxu0 0.0
  %1803 = vmatprep.subr.mxu0 0.0
  %1804 = vmatpush1.msra.mxu0 0.0
  %1805 = vmatprep.subr.mxu0 0.0
  %1806 = vmatpush1.msra.mxu0 0.0
  %1807 = vmatprep.subr.mxu0 0.0
  %1808 = vmatpush1.msra.mxu0 0.0
  %1809 = vmatprep.subr.mxu0 0.0
  %1810 = vmatpush1.msra.mxu0 0.0
  %1811 = vmatprep.subr.mxu0 0.0
  %1812 = vmatpush1.msra.mxu0 0.0
  %1813 = vmatprep.subr.mxu0 0.0
  %1814 = vmatpush1.msra.mxu0 0.0
  %1815 = vmatprep.subr.mxu0 0.0
  %1816 = vmatpush1.msra.mxu0 0.0
  %1817 = vmatprep.subr.mxu0 0.0
  %1818 = vmatpush1.msra.mxu0 0.0
  %1819 = vmatprep.subr.mxu0 0.0
  %1820 = vmatpush1.msra.mxu0 0.0
  %1821 = vmatprep.subr.mxu0 0.0
  %1822 = vmatpush1.msra.mxu0 0.0
  %1823 = vmatprep.subr.mxu0 0.0
  %1824 = vmatpush1.msra.mxu0 0.0
  %1825 = vmatprep.subr.mxu0 0.0
  %1826 = vmatpush1.msra.mxu0 0.0
  %1827 = vmatprep.subr.mxu0 0.0
  %1828 = vmatpush1.msra.mxu0 0.0
  %1829 = vmatprep.subr.mxu0 0.0
  %1830 = vmatpush1.msra.mxu0 0.0
  %1831 = vmatprep.subr.mxu0 0.0
  %1832 = vmatpush1.msra.mxu0 0.0
  %1833 = vmatprep.subr.mxu0 0.0
  %1834 = vmatpush1.msra.mxu0 0.0
  %1835 = vmatprep.subr.mxu0 0.0
  %1836 = vmatpush1.msra.mxu0 0.0
  %1837 = vmatprep.subr.mxu0 0.0
  %1838 = vmatpush1.msra.mxu0 0.0
  %1839 = vmatprep.subr.mxu0 0.0
  %1840 = vmatpush1.msra.mxu0 0.0
  %1841 = vmatprep.mubr.f32.mxu0 0.0
  %1842 = vmatmul.mubr.f32.gmra.mrb[0].mxu0 %v1775
  %v1843 = vpop.f32.mrb[0].mxu0
  %v1844 = vadd.f32 0.0, %v1843
  %v1845 = vpop.f32.mrb[0].mxu0
  %1846 = vdwg.mxu0
  %v1847 = vadd.f32 %v1126, %v1844
  %v1848 = vxor.u32 %v1847, 2147483648
  %v1849 = vmul.f32 %v1848, 1.442695
  %v1850 = vpow.pop %v1849
  %v1851 = vadd.f32 %v1850, 1.0
  %v1852 = vrcp.pop %v1851
  %v1853 = vmul.f32 1.0, %v1852
  %v1854 = vadd.f32 %v1844, %v1217
  %1856 = vrot.lane.b32.xlu0 %v1854, 64
  %v1857 = vpop.permute.xlu0 %1856
  %v1859 = vmul.f32 %v1853, %v1857
  %1861 = vrot.lane.b32.xlu0 %v1859, 64
  %v1862 = vpop.permute.xlu0 %1861
  %v1864 = vadd.f32 %v1126, %v1862
  %v1865 = vtanh.pop %v1864
  %v1866 = vsub.f32 1.0, %v1853
  %1868 = vrot.lane.b32.xlu0 %v1865, 96
  %v1869 = vpop.permute.xlu0 %1868
  %v1871 = vmul.f32 %v1866, %v1869
  %v1873 = vmul.f32 %v1853, %v1772
  %v1874 = vadd.f32 %v1871, %v1873
  %1876 = vrot.lane.b32.xlu0 %v1874, 96
  %v1877 = vpop.permute.xlu0 %1876
  %v1878 = vsel %vm53, %v1877, 0
  %1880 = vmatprep.subr.mxu0 0.0
  %1881 = vmatpush1.msra.mxu0 %v1129
  %1882 = vmatprep.subr.mxu0 0.0
  %1883 = vmatpush1.msra.mxu0 %v1130
  %1884 = vmatprep.subr.mxu0 0.0
  %1885 = vmatpush1.msra.mxu0 %v1131
  %1886 = vmatprep.subr.mxu0 0.0
  %1887 = vmatpush1.msra.mxu0 %v1132
  %1888 = vmatprep.subr.mxu0 0.0
  %1889 = vmatpush1.msra.mxu0 0.0
  %1890 = vmatprep.subr.mxu0 0.0
  %1891 = vmatpush1.msra.mxu0 0.0
  %1892 = vmatprep.subr.mxu0 0.0
  %1893 = vmatpush1.msra.mxu0 0.0
  %1894 = vmatprep.subr.mxu0 0.0
  %1895 = vmatpush1.msra.mxu0 0.0
  %1896 = vmatprep.subr.mxu0 0.0
  %1897 = vmatpush1.msra.mxu0 0.0
  %1898 = vmatprep.subr.mxu0 0.0
  %1899 = vmatpush1.msra.mxu0 0.0
  %1900 = vmatprep.subr.mxu0 0.0
  %1901 = vmatpush1.msra.mxu0 0.0
  %1902 = vmatprep.subr.mxu0 0.0
  %1903 = vmatpush1.msra.mxu0 0.0
  %1904 = vmatprep.subr.mxu0 0.0
  %1905 = vmatpush1.msra.mxu0 0.0
  %1906 = vmatprep.subr.mxu0 0.0
  %1907 = vmatpush1.msra.mxu0 0.0
  %1908 = vmatprep.subr.mxu0 0.0
  %1909 = vmatpush1.msra.mxu0 0.0
  %1910 = vmatprep.subr.mxu0 0.0
  %1911 = vmatpush1.msra.mxu0 0.0
  %1912 = vmatprep.subr.mxu0 0.0
  %1913 = vmatpush1.msra.mxu0 0.0
  %1914 = vmatprep.subr.mxu0 0.0
  %1915 = vmatpush1.msra.mxu0 0.0
  %1916 = vmatprep.subr.mxu0 0.0
  %1917 = vmatpush1.msra.mxu0 0.0
  %1918 = vmatprep.subr.mxu0 0.0
  %1919 = vmatpush1.msra.mxu0 0.0
  %1920 = vmatprep.subr.mxu0 0.0
  %1921 = vmatpush1.msra.mxu0 0.0
  %1922 = vmatprep.subr.mxu0 0.0
  %1923 = vmatpush1.msra.mxu0 0.0
  %1924 = vmatprep.subr.mxu0 0.0
  %1925 = vmatpush1.msra.mxu0 0.0
  %1926 = vmatprep.subr.mxu0 0.0
  %1927 = vmatpush1.msra.mxu0 0.0
  %1928 = vmatprep.subr.mxu0 0.0
  %1929 = vmatpush1.msra.mxu0 0.0
  %1930 = vmatprep.subr.mxu0 0.0
  %1931 = vmatpush1.msra.mxu0 0.0
  %1932 = vmatprep.subr.mxu0 0.0
  %1933 = vmatpush1.msra.mxu0 0.0
  %1934 = vmatprep.subr.mxu0 0.0
  %1935 = vmatpush1.msra.mxu0 0.0
  %1936 = vmatprep.subr.mxu0 0.0
  %1937 = vmatpush1.msra.mxu0 0.0
  %1938 = vmatprep.subr.mxu0 0.0
  %1939 = vmatpush1.msra.mxu0 0.0
  %1940 = vmatprep.subr.mxu0 0.0
  %1941 = vmatpush1.msra.mxu0 0.0
  %1942 = vmatprep.subr.mxu0 0.0
  %1943 = vmatpush1.msra.mxu0 0.0
  %1944 = vmatprep.mubr.f32.mxu0 0.0
  %1945 = vmatmul.mubr.f32.gmra.mrb[0].mxu0 %v1878
  %v1946 = vpop.f32.mrb[0].mxu0
  %v1947 = vadd.f32 0.0, %v1946
  %v1948 = vpop.f32.mrb[0].mxu0
  %1949 = vdwg.mxu0
  %v1951 = vrot.slane %v1947, 4
  %v1953 = vadd.f32 %v1126, %v1951
  %v1954 = vxor.u32 %v1953, 2147483648
  %v1955 = vmul.f32 %v1954, 1.442695
  %v1956 = vpow.pop %v1955
  %v1957 = vadd.f32 %v1956, 1.0
  %v1958 = vrcp.pop %v1957
  %v1959 = vmul.f32 1.0, %v1958
  %v1960 = vadd.f32 %v1947, %v1217
  %v1962 = vrot.slane %v1960, 4
  %1963 = vrot.lane.b32.xlu0 %v1962, 64
  %v1964 = vpop.permute.xlu0 %1963
  %v1966 = vmul.f32 %v1959, %v1964
  %1968 = vrot.lane.b32.xlu0 %v1966, 64
  %v1969 = vpop.permute.xlu0 %1968
  %v1971 = vadd.f32 %v1126, %v1969
  %v1972 = vtanh.pop %v1971
  %v1973 = vsub.f32 1.0, %v1959
  %1975 = vrot.lane.b32.xlu0 %v1972, 96
  %v1976 = vpop.permute.xlu0 %1975
  %v1978 = vmul.f32 %v1973, %v1976
  %v1979 = vrot.slane %v1874, 4
  %v1981 = vmul.f32 %v1959, %v1979
  %v1982 = vadd.f32 %v1978, %v1981
  %v1983 = vsel %vm1008, %v1238, %v1346
  %v1984 = vsel %vm1008, %v1450, %v1558
  %v1985 = vsel %vm1008, %v1662, %v1770
  %v1986 = vsel %vm1008, %v1874, %v1982
  %v1987 = vld [vmem:[%s9] sm:$0xff]
  %v1988 = vld [vmem:[%s9 + $0x8] sm:$0xff]
  %v1989 = vld [vmem:[%s9 + $0x10] sm:$0xff]
  %v1990 = vld [vmem:[%s9 + $0x18] sm:$0xff]
  %v1991 = vld [vmem:[%s10] sm:$0x1]
  %v1993 = vlaneseq
  %v1994 = vshrl.u32 %v1993, 7
  %v1995 = vsub.s32 0, %v1994
  %v1996 = vrot.slane %v1991, %v1995
  %2002 = vrot.lane.b32.xlu0 %v1983, 96
  %v2003 = vpop.permute.xlu0 %2002
  %2004 = vrot.lane.b32.xlu0 %v1984, 96
  %v2005 = vpop.permute.xlu0 %2004
  %2006 = vrot.lane.b32.xlu0 %v1985, 96
  %v2007 = vpop.permute.xlu0 %2006
  %2008 = vrot.lane.b32.xlu0 %v1986, 96
  %v2009 = vpop.permute.xlu0 %2008
  %v2010 = vsel %vm53, %v2003, 0
  %v2012 = vsel %vm53, %v2005, 0
  %v2014 = vsel %vm53, %v2007, 0
  %v2016 = vsel %vm53, %v2009, 0
  %2018 = vmatprep.subr.mxu0 0.0
  %2019 = vmatpush1.msra.mxu0 %v1987
  %2020 = vmatprep.subr.mxu0 0.0
  %2021 = vmatpush1.msra.mxu0 %v1988
  %2022 = vmatprep.subr.mxu0 0.0
  %2023 = vmatpush1.msra.mxu0 %v1989
  %2024 = vmatprep.subr.mxu0 0.0
  %2025 = vmatpush1.msra.mxu0 %v1990
  %2026 = vmatprep.subr.mxu0 0.0
  %2027 = vmatpush1.msra.mxu0 0.0
  %2028 = vmatprep.subr.mxu0 0.0
  %2029 = vmatpush1.msra.mxu0 0.0
  %2030 = vmatprep.subr.mxu0 0.0
  %2031 = vmatpush1.msra.mxu0 0.0
  %2032 = vmatprep.subr.mxu0 0.0
  %2033 = vmatpush1.msra.mxu0 0.0
  %2034 = vmatprep.subr.mxu0 0.0
  %2035 = vmatpush1.msra.mxu0 0.0
  %2036 = vmatprep.subr.mxu0 0.0
  %2037 = vmatpush1.msra.mxu0 0.0
  %2038 = vmatprep.subr.mxu0 0.0
  %2039 = vmatpush1.msra.mxu0 0.0
  %2040 = vmatprep.subr.mxu0 0.0
  %2041 = vmatpush1.msra.mxu0 0.0
  %2042 = vmatprep.subr.mxu0 0.0
  %2043 = vmatpush1.msra.mxu0 0.0
  %2044 = vmatprep.subr.mxu0 0.0
  %2045 = vmatpush1.msra.mxu0 0.0
  %2046 = vmatprep.subr.mxu0 0.0
  %2047 = vmatpush1.msra.mxu0 0.0
  %2048 = vmatprep.subr.mxu0 0.0
  %2049 = vmatpush1.msra.mxu0 0.0
  %2050 = vmatprep.subr.mxu0 0.0
  %2051 = vmatpush1.msra.mxu0 0.0
  %2052 = vmatprep.subr.mxu0 0.0
  %2053 = vmatpush1.msra.mxu0 0.0
  %2054 = vmatprep.subr.mxu0 0.0
  %2055 = vmatpush1.msra.mxu0 0.0
  %2056 = vmatprep.subr.mxu0 0.0
  %2057 = vmatpush1.msra.mxu0 0.0
  %2058 = vmatprep.subr.mxu0 0.0
  %2059 = vmatpush1.msra.mxu0 0.0
  %2060 = vmatprep.subr.mxu0 0.0
  %2061 = vmatpush1.msra.mxu0 0.0
  %2062 = vmatprep.subr.mxu0 0.0
  %2063 = vmatpush1.msra.mxu0 0.0
  %2064 = vmatprep.subr.mxu0 0.0
  %2065 = vmatpush1.msra.mxu0 0.0
  %2066 = vmatprep.subr.mxu0 0.0
  %2067 = vmatpush1.msra.mxu0 0.0
  %2068 = vmatprep.subr.mxu0 0.0
  %2069 = vmatpush1.msra.mxu0 0.0
  %2070 = vmatprep.subr.mxu0 0.0
  %2071 = vmatpush1.msra.mxu0 0.0
  %2072 = vmatprep.subr.mxu0 0.0
  %2073 = vmatpush1.msra.mxu0 0.0
  %2074 = vmatprep.subr.mxu0 0.0
  %2075 = vmatpush1.msra.mxu0 0.0
  %2076 = vmatprep.subr.mxu0 0.0
  %2077 = vmatpush1.msra.mxu0 0.0
  %2078 = vmatprep.subr.mxu0 0.0
  %2079 = vmatpush1.msra.mxu0 0.0
  %2080 = vmatprep.subr.mxu0 0.0
  %2081 = vmatpush1.msra.mxu0 0.0
  %2082 = vmatprep.mubr.f32.mxu0 0.0
  %2083 = vmatmul.mubr.f32.gmra.mrb[0].mxu0 %v2010
  %v2084 = vpop.f32.mrb[0].mxu0
  %v2085 = vadd.f32 %v1996, %v2084
  %v2086 = vpop.f32.mrb[0].mxu0
  %2087 = vmatprep.mubr.f32.mxu0 0.0
  %2088 = vmatmul.mubr.f32.gmra.mrb[0].mxu0 %v2012
  %v2089 = vpop.f32.mrb[0].mxu0
  %v2090 = vadd.f32 %v1996, %v2089
  %v2091 = vpop.f32.mrb[0].mxu0
  %2092 = vmatprep.mubr.f32.mxu0 0.0
  %2093 = vmatmul.mubr.f32.gmra.mrb[0].mxu0 %v2014
  %v2094 = vpop.f32.mrb[0].mxu0
  %v2095 = vadd.f32 %v1996, %v2094
  %v2096 = vpop.f32.mrb[0].mxu0
  %2097 = vmatprep.mubr.f32.mxu0 0.0
  %2098 = vmatmul.mubr.f32.gmra.mrb[0].mxu0 %v2016
  %v2099 = vpop.f32.mrb[0].mxu0
  %v2100 = vadd.f32 %v1996, %v2099
  %v2101 = vpop.f32.mrb[0].mxu0
  %2102 = vdwg.mxu0
  %v2103 = vxor.u32 %v2085, 2147483648
  %v2104 = vxor.u32 %v2090, 2147483648
  %v2105 = vxor.u32 %v2095, 2147483648
  %v2106 = vxor.u32 %v2100, 2147483648
  %v2107 = vmul.f32 %v2103, 1.442695
  %v2108 = vpow.pop %v2107
  %v2109 = vmul.f32 %v2104, 1.442695
  %v2110 = vpow.pop %v2109
  %v2111 = vmul.f32 %v2105, 1.442695
  %v2112 = vpow.pop %v2111
  %v2113 = vmul.f32 %v2106, 1.442695
  %v2114 = vpow.pop %v2113
  %v2115 = vadd.f32 %v2108, 1.0
  %v2116 = vadd.f32 %v2110, 1.0
  %v2117 = vadd.f32 %v2112, 1.0
  %v2118 = vadd.f32 %v2114, 1.0
  %v2119 = vrcp.pop %v2115
  %v2120 = vmul.f32 1.0, %v2119
  %v2121 = vrcp.pop %v2116
  %v2122 = vmul.f32 1.0, %v2121
  %v2123 = vrcp.pop %v2117
  %v2124 = vmul.f32 1.0, %v2123
  %v2125 = vrcp.pop %v2118
  %v2126 = vmul.f32 1.0, %v2125
  %2127 = vst.msk [vmem:[%s11] sm:$0xff] %vm53, %v2120
  %2128 = vst.msk [vmem:[%s11 + $0x8] sm:$0xff] %vm53, %v2122
  %2129 = vst.msk [vmem:[%s11 + $0x10] sm:$0xff] %vm53, %v2124
  %2130 = vst.msk [vmem:[%s11 + $0x18] sm:$0xff] %vm53, %v2126
  // Predicated region
  $region46: #{_supervisor_forward.1} parent=0 // pred_check
    _
  $region47: #{_supervisor_forward.1} parent=0 // pred_check_branch
    %2132 = sbr.rel (0) target = $region49
  $region48: #{_supervisor_forward.1} parent=0 // pred_region
    _
  $region49: #{_supervisor_forward.1} parent=0 // pred_fallthru
    _
  // Predicated region
  $region50: #{_supervisor_forward.1} parent=0 // pred_check
    _
  $region51: #{_supervisor_forward.1} parent=0 // pred_check_branch
    %2134 = sbr.rel (0) target = $region53
  $region52: #{_supervisor_forward.1} parent=0 // pred_region
    _
  $region53: #{_supervisor_forward.1} parent=0 // pred_fallthru
    _

</llo_original>
